<compile_context>
chip_gen: v5e
topology: v5e:2x2
jax: 0.10.0
libtpu: 0.0.40
codegen_flags: <defaults>
</compile_context>

<pallas_src>
import functools

import jax
import jax.numpy as jnp
from jax import lax
from jax.experimental import pallas as pl
from jax.experimental.pallas import tpu as pltpu


def _rnn_kernel(num_layers, hid_size, seq_len, batch_pad,
                strain_ref, w_eff_ref, bias_ref, *rest):
    """Wavefront LSTM stack.

    rest = [W_rec_0, ..., W_rec_{L-1}, hs_out_ref]
      W_rec_l = [w_hh_l | w_ih_{l+1}]  (H, 8H)   for l < L-1
      W_rec_{L-1} = w_hh_{L-1}         (H, 4H)
    Output hs_out_ref: top layer hidden states, rows = t*Bp + b.
    """
    L, H, T, Bp = num_layers, hid_size, seq_len, batch_pad
    w_refs = rest[:L]
    hs_out_ref = rest[L]
    G4 = 4 * H

    # Hoisted bulk layer-0 input projection for ALL timesteps at once:
    # (T*Bp, F) x (F, 4H). Kept as a value (8 vregs at these sizes) so the
    # serial recurrence reads it with static slices, no VMEM round trip.
    gx0 = jnp.dot(strain_ref[...], w_eff_ref[...],
                  preferred_element_type=jnp.float32)
    bias_all = bias_ref[...]                       # (Bp, L*4H)
    w_rec = [w_refs[l][...] for l in range(L)]     # loop-invariant weight loads

    zeros = jnp.zeros((Bp, H), jnp.float32)
    h = [zeros for _ in range(L)]
    c = [zeros for _ in range(L)]

    def active(l, w):
        return 0 <= w - l < T

    # Wavefront: at wave w, layer l processes timestep t = w - l.  All matmuls
    # of one wave depend only on the previous wave's states, so they are
    # mutually independent and their MXU/EUP latencies overlap.
    for w in range(T + L - 1):
        prods = [None] * L
        for l in range(L):
            if active(l, w) or (l + 1 < L and active(l + 1, w)):
                prods[l] = jnp.dot(h[l], w_rec[l],
                                   preferred_element_type=jnp.float32)
        for l in range(L):
            if not active(l, w):
                continue
            t = w - l
            g = prods[l][:, :G4] + bias_all[:, l * G4:(l + 1) * G4]
            if l == 0:
                g = g + gx0[t * Bp:(t + 1) * Bp, :]
            else:
                # next-layer input contribution computed by layer (l-1)'s
                # widened matmul in this same wave.
                g = g + prods[l - 1][:, G4:2 * G4]
            # Gate columns pre-permuted to [i, f, o, g]:
            sig = jax.nn.sigmoid(g[:, :3 * H])       # one EUP pass: i, f, o
            g_g = jnp.tanh(g[:, 3 * H:])             # one EUP pass: g
            i_g = sig[:, :H]
            f_g = sig[:, H:2 * H]
            o_g = sig[:, 2 * H:]
            c_new = f_g * c[l] + i_g * g_g
            h_new = o_g * jnp.tanh(c_new)
            h[l], c[l] = h_new, c_new
            if l == L - 1:
                # Only the top layer's hidden state ever touches VMEM.
                hs_out_ref[pl.ds(t * Bp, Bp), :] = h_new


def _permute_gate_cols(w, H):
    """PyTorch gate order [i, f, g, o] -> [i, f, o, g] along the last axis."""
    return jnp.concatenate(
        [w[..., 0:H], w[..., H:2 * H], w[..., 3 * H:4 * H], w[..., 2 * H:3 * H]],
        axis=-1)


def rnn_forward(gnn_outputs, strain_matrix, params):
    """gnn_outputs: (B, G); strain_matrix: (B, T, 10).  Returns (B, T, 1)."""
    B, T, F_in = strain_matrix.shape
    L = len(params["w_ih"])
    H = params["w_hh"][0].shape[0]
    G = gnn_outputs.shape[-1]
    Bp = max(8, -(-B // 8) * 8)          # pad batch to a full f32 sublane tile
    hi = jax.lax.Precision.HIGHEST

    gnn = gnn_outputs.astype(jnp.float32)
    strain = strain_matrix.astype(jnp.float32)

    # Time-major, batch-padded, flattened to rows (row = t*Bp + b).
    strain_tm = jnp.transpose(strain, (1, 0, 2))                    # (T, B, F)
    strain_tm = jnp.pad(strain_tm, ((0, 0), (0, Bp - B), (0, 0)))   # (T, Bp, F)
    strain_flat = strain_tm.reshape(T * Bp, F_in)
    gnn_p = jnp.pad(gnn, ((0, Bp - B), (0, 0)))                     # (Bp, G)

    # Permute gate columns to [i, f, o, g] (wrapper-side layout plumbing).
    w_ih = [_permute_gate_cols(w.astype(jnp.float32), H) for w in params["w_ih"]]
    w_hh = [_permute_gate_cols(w.astype(jnp.float32), H) for w in params["w_hh"]]
    b = [_permute_gate_cols(bb.astype(jnp.float32), H) for bb in params["b"]]

    # Fold fc1_in_rnn + concat([gnn, strain_proj]) into layer-0 input weights.
    w_in = params["w_in"].astype(jnp.float32)
    b_in = params["b_in"].astype(jnp.float32)
    w_eff = jnp.dot(w_in, w_ih[0][G:, :], precision=hi)             # (F, 4H)
    bias0 = (jnp.dot(gnn_p, w_ih[0][:G, :], precision=hi)
             + jnp.dot(b_in, w_ih[0][G:, :], precision=hi)
             + b[0])                                                # (Bp, 4H)
    bias_blocks = [bias0] + [jnp.broadcast_to(b[l], (Bp, 4 * H)) for l in range(1, L)]
    bias_all = jnp.concatenate(bias_blocks, axis=1)                 # (Bp, L*4H)

    # Per-layer widened recurrent RHS: [w_hh_l | w_ih_{l+1}].
    w_rec = []
    for l in range(L):
        if l + 1 < L:
            w_rec.append(jnp.concatenate([w_hh[l], w_ih[l + 1]], axis=1))  # (H, 8H)
        else:
            w_rec.append(w_hh[l])                                          # (H, 4H)

    inputs = [strain_flat, w_eff, bias_all] + w_rec

    # Advisory cost hint so XLA schedules neighbouring wrapper ops sensibly.
    flops = int(2 * T * Bp * F_in * 4 * H
                + (T + L - 1) * L * 2 * Bp * H * 8 * H
                + 10 * L * T * Bp * 4 * H)
    transcendentals = int(L * T * Bp * 5 * H)
    bytes_accessed = int(4 * (sum(int(a.size) for a in inputs) + T * Bp * H))

    kernel = functools.partial(_rnn_kernel, L, H, T, Bp)
    hs_flat = pl.pallas_call(
        kernel,
        out_shape=jax.ShapeDtypeStruct((T * Bp, H), jnp.float32),
        in_specs=[pl.BlockSpec(memory_space=pltpu.MemorySpace.VMEM)] * len(inputs),
        out_specs=pl.BlockSpec(memory_space=pltpu.MemorySpace.VMEM),
        cost_estimate=pl.CostEstimate(flops=flops,
                                      transcendentals=transcendentals,
                                      bytes_accessed=bytes_accessed),
    )(*inputs)

    # fc1_out head (N=1 matmul) as a plain XLA op — kernel output stays dense.
    hs = hs_flat.reshape(T, Bp, H)[:, :B]                           # (T, B, H)
    out = hs @ params["w_out"].astype(jnp.float32) + params["b_out"].astype(jnp.float32)
    return jnp.transpose(out, (1, 0, 2))                            # (B, T, 1)


def rnn_reference(gnn_outputs, strain_matrix, params):
    """Pure-JAX reference matching the PyTorch forward (eval / dropout=0)."""
    B, T, _ = strain_matrix.shape
    sp = strain_matrix @ params["w_in"] + params["b_in"]          # (B,T,S)
    x = jnp.concatenate(
        [jnp.broadcast_to(gnn_outputs[:, None, :],
                          (B, T, gnn_outputs.shape[-1])), sp], axis=-1)
    H = params["w_hh"][0].shape[0]
    seq = x
    for l in range(len(params["w_ih"])):
        w_ih, w_hh, b = params["w_ih"][l], params["w_hh"][l], params["b"][l]

        def cell(carry, x_t):
            h, c = carry
            gates = x_t @ w_ih + h @ w_hh + b[0]
            i_g = jax.nn.sigmoid(gates[:, 0 * H:1 * H])
            f_g = jax.nn.sigmoid(gates[:, 1 * H:2 * H])
            g_g = jnp.tanh(gates[:, 2 * H:3 * H])
            o_g = jax.nn.sigmoid(gates[:, 3 * H:4 * H])
            c_new = f_g * c + i_g * g_g
            h_new = o_g * jnp.tanh(c_new)
            return (h_new, c_new), h_new

        z = jnp.zeros((B, H), jnp.float32)
        _, hs = lax.scan(cell, (z, z), jnp.transpose(seq, (1, 0, 2)))
        seq = jnp.transpose(hs, (1, 0, 2))
    return seq @ params["w_out"] + params["b_out"][0]


def make_params(key, strain_feat, strain_dim, gnn_dim, hid_size, num_layers):
    input_size = strain_dim + gnn_dim
    keys = jax.random.split(key, 4 + 3 * num_layers)
    scale = 0.1
    params = {
        "w_in": scale * jax.random.normal(keys[0], (strain_feat, strain_dim), jnp.float32),
        "b_in": scale * jax.random.normal(keys[1], (1, strain_dim), jnp.float32),
        "w_out": scale * jax.random.normal(keys[2], (hid_size, 1), jnp.float32),
        "b_out": scale * jax.random.normal(keys[3], (1, 1), jnp.float32),
        "w_ih": [], "w_hh": [], "b": [],
    }
    for l in range(num_layers):
        d_in = input_size if l == 0 else hid_size
        k0, k1, k2 = keys[4 + 3 * l], keys[5 + 3 * l], keys[6 + 3 * l]
        params["w_ih"].append(scale * jax.random.normal(k0, (d_in, 4 * hid_size), jnp.float32))
        params["w_hh"].append(scale * jax.random.normal(k1, (hid_size, 4 * hid_size), jnp.float32))
        # combined bias (b_ih + b_hh in PyTorch)
        params["b"].append(scale * jax.random.normal(k2, (1, 4 * hid_size), jnp.float32))
    return params


if __name__ == "__main__":
    # args: strain_dim=16, input_size=32 (gnn_dim=16 + strain_dim=16),
    #       hid_size=32, num_layers=2, lstm_dropout=0.0
    B, T = 2, 8
    STRAIN_FEAT, STRAIN_DIM, GNN_DIM, HID, LAYERS = 10, 16, 16, 32, 2

    key = jax.random.PRNGKey(0)
    k_gnn, k_strain, k_params = jax.random.split(key, 3)
    gnn_outputs = jax.random.normal(k_gnn, (B, GNN_DIM), jnp.float32)
    strain_matrix = jax.random.normal(k_strain, (B, T, STRAIN_FEAT), jnp.float32)
    params = make_params(k_params, STRAIN_FEAT, STRAIN_DIM, GNN_DIM, HID, LAYERS)

    out = rnn_forward(gnn_outputs, strain_matrix, params)
    jax.block_until_ready(out)

    ref = rnn_reference(gnn_outputs, strain_matrix, params)
    assert out.shape == (B, T, 1), out.shape
    # Weight folding / matmul hoisting changes f.p. summation order relative
    # to the step-by-step reference, so use a slightly looser tolerance.
    err = float(jnp.abs(out - ref).max())
    assert jnp.allclose(out, ref, atol=2e-3, rtol=2e-3), err

    print("KERNEL_OK")
</pallas_src>

<mosaic_0001>
module attributes {stable_mosaic.version = 11 : i64} {
  func.func @_rnn_kernel(%arg0: memref<64x10xf32, #tpu.memory_space<vmem>>, %arg1: memref<10x128xf32, #tpu.memory_space<vmem>>, %arg2: memref<8x256xf32, #tpu.memory_space<vmem>>, %arg3: memref<32x256xf32, #tpu.memory_space<vmem>>, %arg4: memref<32x128xf32, #tpu.memory_space<vmem>>, %arg5: memref<64x32xf32, #tpu.memory_space<vmem>>) attributes {dimension_semantics = [], scalar_prefetch = 0 : i64, scratch_operands = 0 : i64, tpu.core_type = #tpu.core_type<tc>} {
    %c0 = arith.constant 0 : index
    %c0_0 = arith.constant 0 : index
    %0 = vector.load %arg0[%c0, %c0_0] : memref<64x10xf32, #tpu.memory_space<vmem>>, vector<64x10xf32>
    %c0_1 = arith.constant 0 : index
    %c0_2 = arith.constant 0 : index
    %1 = vector.load %arg1[%c0_1, %c0_2] : memref<10x128xf32, #tpu.memory_space<vmem>>, vector<10x128xf32>
    %cst = arith.constant dense<0.000000e+00> : vector<64x128xf32>
    %2 = tpu.matmul %0, %1, %cst {dimension_numbers = #tpu.dot_dimension_numbers<[1], [0], [0], [1], [0, 0, 1, 1], [], []>} : vector<64x10xf32>, vector<10x128xf32>, vector<64x128xf32> -> vector<64x128xf32>
    %c0_3 = arith.constant 0 : index
    %c0_4 = arith.constant 0 : index
    %3 = vector.load %arg2[%c0_3, %c0_4] : memref<8x256xf32, #tpu.memory_space<vmem>>, vector<8x256xf32>
    %c0_5 = arith.constant 0 : index
    %c0_6 = arith.constant 0 : index
    %4 = vector.load %arg3[%c0_5, %c0_6] : memref<32x256xf32, #tpu.memory_space<vmem>>, vector<32x256xf32>
    %c0_7 = arith.constant 0 : index
    %c0_8 = arith.constant 0 : index
    %5 = vector.load %arg4[%c0_7, %c0_8] : memref<32x128xf32, #tpu.memory_space<vmem>>, vector<32x128xf32>
    %cst_9 = arith.constant 0.000000e+00 : f32
    %6 = vector.broadcast %cst_9 : f32 to vector<8x32xf32>
    %cst_10 = arith.constant dense<0.000000e+00> : vector<8x256xf32>
    %7 = tpu.matmul %6, %4, %cst_10 {dimension_numbers = #tpu.dot_dimension_numbers<[1], [0], [0], [1], [0, 0, 1, 1], [], []>} : vector<8x32xf32>, vector<32x256xf32>, vector<8x256xf32> -> vector<8x256xf32>
    %8 = vector.extract_strided_slice %7 {offsets = [0, 0], sizes = [8, 128], strides = [1, 1]} : vector<8x256xf32> to vector<8x128xf32>
    %9 = vector.extract_strided_slice %3 {offsets = [0, 0], sizes = [8, 128], strides = [1, 1]} : vector<8x256xf32> to vector<8x128xf32>
    %10 = arith.addf %8, %9 : vector<8x128xf32>
    %11 = vector.extract_strided_slice %2 {offsets = [0, 0], sizes = [8, 128], strides = [1, 1]} : vector<64x128xf32> to vector<8x128xf32>
    %12 = arith.addf %10, %11 : vector<8x128xf32>
    %13 = vector.extract_strided_slice %12 {offsets = [0, 0], sizes = [8, 96], strides = [1, 1]} : vector<8x128xf32> to vector<8x96xf32>
    %14 = arith.negf %13 : vector<8x96xf32>
    %15 = math.exp %14 : vector<8x96xf32>
    %cst_11 = arith.constant 1.000000e+00 : f32
    %16 = vector.broadcast %cst_11 : f32 to vector<8x96xf32>
    %17 = arith.addf %16, %15 : vector<8x96xf32>
    %18 = arith.divf %16, %17 : vector<8x96xf32>
    %19 = vector.extract_strided_slice %12 {offsets = [0, 96], sizes = [8, 32], strides = [1, 1]} : vector<8x128xf32> to vector<8x32xf32>
    %20 = math.tanh %19 : vector<8x32xf32>
    %21 = vector.extract_strided_slice %18 {offsets = [0, 0], sizes = [8, 32], strides = [1, 1]} : vector<8x96xf32> to vector<8x32xf32>
    %22 = vector.extract_strided_slice %18 {offsets = [0, 32], sizes = [8, 32], strides = [1, 1]} : vector<8x96xf32> to vector<8x32xf32>
    %23 = vector.extract_strided_slice %18 {offsets = [0, 64], sizes = [8, 32], strides = [1, 1]} : vector<8x96xf32> to vector<8x32xf32>
    %24 = arith.mulf %22, %6 : vector<8x32xf32>
    %25 = arith.mulf %21, %20 : vector<8x32xf32>
    %26 = arith.addf %24, %25 : vector<8x32xf32>
    %27 = math.tanh %26 : vector<8x32xf32>
    %28 = arith.mulf %23, %27 : vector<8x32xf32>
    %cst_12 = arith.constant dense<0.000000e+00> : vector<8x256xf32>
    %29 = tpu.matmul %28, %4, %cst_12 {dimension_numbers = #tpu.dot_dimension_numbers<[1], [0], [0], [1], [0, 0, 1, 1], [], []>} : vector<8x32xf32>, vector<32x256xf32>, vector<8x256xf32> -> vector<8x256xf32>
    %cst_13 = arith.constant dense<0.000000e+00> : vector<8x128xf32>
    %30 = tpu.matmul %6, %5, %cst_13 {dimension_numbers = #tpu.dot_dimension_numbers<[1], [0], [0], [1], [0, 0, 1, 1], [], []>} : vector<8x32xf32>, vector<32x128xf32>, vector<8x128xf32> -> vector<8x128xf32>
    %31 = vector.extract_strided_slice %29 {offsets = [0, 0], sizes = [8, 128], strides = [1, 1]} : vector<8x256xf32> to vector<8x128xf32>
    %32 = vector.extract_strided_slice %3 {offsets = [0, 0], sizes = [8, 128], strides = [1, 1]} : vector<8x256xf32> to vector<8x128xf32>
    %33 = arith.addf %31, %32 : vector<8x128xf32>
    %34 = vector.extract_strided_slice %2 {offsets = [8, 0], sizes = [8, 128], strides = [1, 1]} : vector<64x128xf32> to vector<8x128xf32>
    %35 = arith.addf %33, %34 : vector<8x128xf32>
    %36 = vector.extract_strided_slice %35 {offsets = [0, 0], sizes = [8, 96], strides = [1, 1]} : vector<8x128xf32> to vector<8x96xf32>
    %37 = arith.negf %36 : vector<8x96xf32>
    %38 = math.exp %37 : vector<8x96xf32>
    %cst_14 = arith.constant 1.000000e+00 : f32
    %39 = vector.broadcast %cst_14 : f32 to vector<8x96xf32>
    %40 = arith.addf %39, %38 : vector<8x96xf32>
    %41 = arith.divf %39, %40 : vector<8x96xf32>
    %42 = vector.extract_strided_slice %35 {offsets = [0, 96], sizes = [8, 32], strides = [1, 1]} : vector<8x128xf32> to vector<8x32xf32>
    %43 = math.tanh %42 : vector<8x32xf32>
    %44 = vector.extract_strided_slice %41 {offsets = [0, 0], sizes = [8, 32], strides = [1, 1]} : vector<8x96xf32> to vector<8x32xf32>
    %45 = vector.extract_strided_slice %41 {offsets = [0, 32], sizes = [8, 32], strides = [1, 1]} : vector<8x96xf32> to vector<8x32xf32>
    %46 = vector.extract_strided_slice %41 {offsets = [0, 64], sizes = [8, 32], strides = [1, 1]} : vector<8x96xf32> to vector<8x32xf32>
    %47 = arith.mulf %45, %26 : vector<8x32xf32>
    %48 = arith.mulf %44, %43 : vector<8x32xf32>
    %49 = arith.addf %47, %48 : vector<8x32xf32>
    %50 = math.tanh %49 : vector<8x32xf32>
    %51 = arith.mulf %46, %50 : vector<8x32xf32>
    %52 = vector.extract_strided_slice %3 {offsets = [0, 128], sizes = [8, 128], strides = [1, 1]} : vector<8x256xf32> to vector<8x128xf32>
    %53 = arith.addf %30, %52 : vector<8x128xf32>
    %54 = vector.extract_strided_slice %29 {offsets = [0, 128], sizes = [8, 128], strides = [1, 1]} : vector<8x256xf32> to vector<8x128xf32>
    %55 = arith.addf %53, %54 : vector<8x128xf32>
    %56 = vector.extract_strided_slice %55 {offsets = [0, 0], sizes = [8, 96], strides = [1, 1]} : vector<8x128xf32> to vector<8x96xf32>
    %57 = arith.negf %56 : vector<8x96xf32>
    %58 = math.exp %57 : vector<8x96xf32>
    %cst_15 = arith.constant 1.000000e+00 : f32
    %59 = vector.broadcast %cst_15 : f32 to vector<8x96xf32>
    %60 = arith.addf %59, %58 : vector<8x96xf32>
    %61 = arith.divf %59, %60 : vector<8x96xf32>
    %62 = vector.extract_strided_slice %55 {offsets = [0, 96], sizes = [8, 32], strides = [1, 1]} : vector<8x128xf32> to vector<8x32xf32>
    %63 = math.tanh %62 : vector<8x32xf32>
    %64 = vector.extract_strided_slice %61 {offsets = [0, 0], sizes = [8, 32], strides = [1, 1]} : vector<8x96xf32> to vector<8x32xf32>
    %65 = vector.extract_strided_slice %61 {offsets = [0, 32], sizes = [8, 32], strides = [1, 1]} : vector<8x96xf32> to vector<8x32xf32>
    %66 = vector.extract_strided_slice %61 {offsets = [0, 64], sizes = [8, 32], strides = [1, 1]} : vector<8x96xf32> to vector<8x32xf32>
    %67 = arith.mulf %65, %6 : vector<8x32xf32>
    %68 = arith.mulf %64, %63 : vector<8x32xf32>
    %69 = arith.addf %67, %68 : vector<8x32xf32>
    %70 = math.tanh %69 : vector<8x32xf32>
    %71 = arith.mulf %66, %70 : vector<8x32xf32>
    %c0_16 = arith.constant 0 : index
    %c0_17 = arith.constant 0 : index
    %72 = vector.load %arg5[%c0_16, %c0_17] : memref<64x32xf32, #tpu.memory_space<vmem>>, vector<8x32xf32>
    tpu.vector_store %arg5[%c0_16, %c0_17], %71 {strides = array<i32>} : memref<64x32xf32, #tpu.memory_space<vmem>>, vector<8x32xf32>,
    %cst_18 = arith.constant dense<0.000000e+00> : vector<8x256xf32>
    %73 = tpu.matmul %51, %4, %cst_18 {dimension_numbers = #tpu.dot_dimension_numbers<[1], [0], [0], [1], [0, 0, 1, 1], [], []>} : vector<8x32xf32>, vector<32x256xf32>, vector<8x256xf32> -> vector<8x256xf32>
    %cst_19 = arith.constant dense<0.000000e+00> : vector<8x128xf32>
    %74 = tpu.matmul %71, %5, %cst_19 {dimension_numbers = #tpu.dot_dimension_numbers<[1], [0], [0], [1], [0, 0, 1, 1], [], []>} : vector<8x32xf32>, vector<32x128xf32>, vector<8x128xf32> -> vector<8x128xf32>
    %75 = vector.extract_strided_slice %73 {offsets = [0, 0], sizes = [8, 128], strides = [1, 1]} : vector<8x256xf32> to vector<8x128xf32>
    %76 = vector.extract_strided_slice %3 {offsets = [0, 0], sizes = [8, 128], strides = [1, 1]} : vector<8x256xf32> to vector<8x128xf32>
    %77 = arith.addf %75, %76 : vector<8x128xf32>
    %78 = vector.extract_strided_slice %2 {offsets = [16, 0], sizes = [8, 128], strides = [1, 1]} : vector<64x128xf32> to vector<8x128xf32>
    %79 = arith.addf %77, %78 : vector<8x128xf32>
    %80 = vector.extract_strided_slice %79 {offsets = [0, 0], sizes = [8, 96], strides = [1, 1]} : vector<8x128xf32> to vector<8x96xf32>
    %81 = arith.negf %80 : vector<8x96xf32>
    %82 = math.exp %81 : vector<8x96xf32>
    %cst_20 = arith.constant 1.000000e+00 : f32
    %83 = vector.broadcast %cst_20 : f32 to vector<8x96xf32>
    %84 = arith.addf %83, %82 : vector<8x96xf32>
    %85 = arith.divf %83, %84 : vector<8x96xf32>
    %86 = vector.extract_strided_slice %79 {offsets = [0, 96], sizes = [8, 32], strides = [1, 1]} : vector<8x128xf32> to vector<8x32xf32>
    %87 = math.tanh %86 : vector<8x32xf32>
    %88 = vector.extract_strided_slice %85 {offsets = [0, 0], sizes = [8, 32], strides = [1, 1]} : vector<8x96xf32> to vector<8x32xf32>
    %89 = vector.extract_strided_slice %85 {offsets = [0, 32], sizes = [8, 32], strides = [1, 1]} : vector<8x96xf32> to vector<8x32xf32>
    %90 = vector.extract_strided_slice %85 {offsets = [0, 64], sizes = [8, 32], strides = [1, 1]} : vector<8x96xf32> to vector<8x32xf32>
    %91 = arith.mulf %89, %49 : vector<8x32xf32>
    %92 = arith.mulf %88, %87 : vector<8x32xf32>
    %93 = arith.addf %91, %92 : vector<8x32xf32>
    %94 = math.tanh %93 : vector<8x32xf32>
    %95 = arith.mulf %90, %94 : vector<8x32xf32>
    %96 = vector.extract_strided_slice %3 {offsets = [0, 128], sizes = [8, 128], strides = [1, 1]} : vector<8x256xf32> to vector<8x128xf32>
    %97 = arith.addf %74, %96 : vector<8x128xf32>
    %98 = vector.extract_strided_slice %73 {offsets = [0, 128], sizes = [8, 128], strides = [1, 1]} : vector<8x256xf32> to vector<8x128xf32>
    %99 = arith.addf %97, %98 : vector<8x128xf32>
    %100 = vector.extract_strided_slice %99 {offsets = [0, 0], sizes = [8, 96], strides = [1, 1]} : vector<8x128xf32> to vector<8x96xf32>
    %101 = arith.negf %100 : vector<8x96xf32>
    %102 = math.exp %101 : vector<8x96xf32>
    %cst_21 = arith.constant 1.000000e+00 : f32
    %103 = vector.broadcast %cst_21 : f32 to vector<8x96xf32>
    %104 = arith.addf %103, %102 : vector<8x96xf32>
    %105 = arith.divf %103, %104 : vector<8x96xf32>
    %106 = vector.extract_strided_slice %99 {offsets = [0, 96], sizes = [8, 32], strides = [1, 1]} : vector<8x128xf32> to vector<8x32xf32>
    %107 = math.tanh %106 : vector<8x32xf32>
    %108 = vector.extract_strided_slice %105 {offsets = [0, 0], sizes = [8, 32], strides = [1, 1]} : vector<8x96xf32> to vector<8x32xf32>
    %109 = vector.extract_strided_slice %105 {offsets = [0, 32], sizes = [8, 32], strides = [1, 1]} : vector<8x96xf32> to vector<8x32xf32>
    %110 = vector.extract_strided_slice %105 {offsets = [0, 64], sizes = [8, 32], strides = [1, 1]} : vector<8x96xf32> to vector<8x32xf32>
    %111 = arith.mulf %109, %69 : vector<8x32xf32>
    %112 = arith.mulf %108, %107 : vector<8x32xf32>
    %113 = arith.addf %111, %112 : vector<8x32xf32>
    %114 = math.tanh %113 : vector<8x32xf32>
    %115 = arith.mulf %110, %114 : vector<8x32xf32>
    %c8 = arith.constant 8 : index
    %c0_22 = arith.constant 0 : index
    %116 = vector.load %arg5[%c8, %c0_22] : memref<64x32xf32, #tpu.memory_space<vmem>>, vector<8x32xf32>
    tpu.vector_store %arg5[%c8, %c0_22], %115 {strides = array<i32>} : memref<64x32xf32, #tpu.memory_space<vmem>>, vector<8x32xf32>,
    %cst_23 = arith.constant dense<0.000000e+00> : vector<8x256xf32>
    %117 = tpu.matmul %95, %4, %cst_23 {dimension_numbers = #tpu.dot_dimension_numbers<[1], [0], [0], [1], [0, 0, 1, 1], [], []>} : vector<8x32xf32>, vector<32x256xf32>, vector<8x256xf32> -> vector<8x256xf32>
    %cst_24 = arith.constant dense<0.000000e+00> : vector<8x128xf32>
    %118 = tpu.matmul %115, %5, %cst_24 {dimension_numbers = #tpu.dot_dimension_numbers<[1], [0], [0], [1], [0, 0, 1, 1], [], []>} : vector<8x32xf32>, vector<32x128xf32>, vector<8x128xf32> -> vector<8x128xf32>
    %119 = vector.extract_strided_slice %117 {offsets = [0, 0], sizes = [8, 128], strides = [1, 1]} : vector<8x256xf32> to vector<8x128xf32>
    %120 = vector.extract_strided_slice %3 {offsets = [0, 0], sizes = [8, 128], strides = [1, 1]} : vector<8x256xf32> to vector<8x128xf32>
    %121 = arith.addf %119, %120 : vector<8x128xf32>
    %122 = vector.extract_strided_slice %2 {offsets = [24, 0], sizes = [8, 128], strides = [1, 1]} : vector<64x128xf32> to vector<8x128xf32>
    %123 = arith.addf %121, %122 : vector<8x128xf32>
    %124 = vector.extract_strided_slice %123 {offsets = [0, 0], sizes = [8, 96], strides = [1, 1]} : vector<8x128xf32> to vector<8x96xf32>
    %125 = arith.negf %124 : vector<8x96xf32>
    %126 = math.exp %125 : vector<8x96xf32>
    %cst_25 = arith.constant 1.000000e+00 : f32
    %127 = vector.broadcast %cst_25 : f32 to vector<8x96xf32>
    %128 = arith.addf %127, %126 : vector<8x96xf32>
    %129 = arith.divf %127, %128 : vector<8x96xf32>
    %130 = vector.extract_strided_slice %123 {offsets = [0, 96], sizes = [8, 32], strides = [1, 1]} : vector<8x128xf32> to vector<8x32xf32>
    %131 = math.tanh %130 : vector<8x32xf32>
    %132 = vector.extract_strided_slice %129 {offsets = [0, 0], sizes = [8, 32], strides = [1, 1]} : vector<8x96xf32> to vector<8x32xf32>
    %133 = vector.extract_strided_slice %129 {offsets = [0, 32], sizes = [8, 32], strides = [1, 1]} : vector<8x96xf32> to vector<8x32xf32>
    %134 = vector.extract_strided_slice %129 {offsets = [0, 64], sizes = [8, 32], strides = [1, 1]} : vector<8x96xf32> to vector<8x32xf32>
    %135 = arith.mulf %133, %93 : vector<8x32xf32>
    %136 = arith.mulf %132, %131 : vector<8x32xf32>
    %137 = arith.addf %135, %136 : vector<8x32xf32>
    %138 = math.tanh %137 : vector<8x32xf32>
    %139 = arith.mulf %134, %138 : vector<8x32xf32>
    %140 = vector.extract_strided_slice %3 {offsets = [0, 128], sizes = [8, 128], strides = [1, 1]} : vector<8x256xf32> to vector<8x128xf32>
    %141 = arith.addf %118, %140 : vector<8x128xf32>
    %142 = vector.extract_strided_slice %117 {offsets = [0, 128], sizes = [8, 128], strides = [1, 1]} : vector<8x256xf32> to vector<8x128xf32>
    %143 = arith.addf %141, %142 : vector<8x128xf32>
    %144 = vector.extract_strided_slice %143 {offsets = [0, 0], sizes = [8, 96], strides = [1, 1]} : vector<8x128xf32> to vector<8x96xf32>
    %145 = arith.negf %144 : vector<8x96xf32>
    %146 = math.exp %145 : vector<8x96xf32>
    %cst_26 = arith.constant 1.000000e+00 : f32
    %147 = vector.broadcast %cst_26 : f32 to vector<8x96xf32>
    %148 = arith.addf %147, %146 : vector<8x96xf32>
    %149 = arith.divf %147, %148 : vector<8x96xf32>
    %150 = vector.extract_strided_slice %143 {offsets = [0, 96], sizes = [8, 32], strides = [1, 1]} : vector<8x128xf32> to vector<8x32xf32>
    %151 = math.tanh %150 : vector<8x32xf32>
    %152 = vector.extract_strided_slice %149 {offsets = [0, 0], sizes = [8, 32], strides = [1, 1]} : vector<8x96xf32> to vector<8x32xf32>
    %153 = vector.extract_strided_slice %149 {offsets = [0, 32], sizes = [8, 32], strides = [1, 1]} : vector<8x96xf32> to vector<8x32xf32>
    %154 = vector.extract_strided_slice %149 {offsets = [0, 64], sizes = [8, 32], strides = [1, 1]} : vector<8x96xf32> to vector<8x32xf32>
    %155 = arith.mulf %153, %113 : vector<8x32xf32>
    %156 = arith.mulf %152, %151 : vector<8x32xf32>
    %157 = arith.addf %155, %156 : vector<8x32xf32>
    %158 = math.tanh %157 : vector<8x32xf32>
    %159 = arith.mulf %154, %158 : vector<8x32xf32>
    %c16 = arith.constant 16 : index
    %c0_27 = arith.constant 0 : index
    %160 = vector.load %arg5[%c16, %c0_27] : memref<64x32xf32, #tpu.memory_space<vmem>>, vector<8x32xf32>
    tpu.vector_store %arg5[%c16, %c0_27], %159 {strides = array<i32>} : memref<64x32xf32, #tpu.memory_space<vmem>>, vector<8x32xf32>,
    %cst_28 = arith.constant dense<0.000000e+00> : vector<8x256xf32>
    %161 = tpu.matmul %139, %4, %cst_28 {dimension_numbers = #tpu.dot_dimension_numbers<[1], [0], [0], [1], [0, 0, 1, 1], [], []>} : vector<8x32xf32>, vector<32x256xf32>, vector<8x256xf32> -> vector<8x256xf32>
    %cst_29 = arith.constant dense<0.000000e+00> : vector<8x128xf32>
    %162 = tpu.matmul %159, %5, %cst_29 {dimension_numbers = #tpu.dot_dimension_numbers<[1], [0], [0], [1], [0, 0, 1, 1], [], []>} : vector<8x32xf32>, vector<32x128xf32>, vector<8x128xf32> -> vector<8x128xf32>
    %163 = vector.extract_strided_slice %161 {offsets = [0, 0], sizes = [8, 128], strides = [1, 1]} : vector<8x256xf32> to vector<8x128xf32>
    %164 = vector.extract_strided_slice %3 {offsets = [0, 0], sizes = [8, 128], strides = [1, 1]} : vector<8x256xf32> to vector<8x128xf32>
    %165 = arith.addf %163, %164 : vector<8x128xf32>
    %166 = vector.extract_strided_slice %2 {offsets = [32, 0], sizes = [8, 128], strides = [1, 1]} : vector<64x128xf32> to vector<8x128xf32>
    %167 = arith.addf %165, %166 : vector<8x128xf32>
    %168 = vector.extract_strided_slice %167 {offsets = [0, 0], sizes = [8, 96], strides = [1, 1]} : vector<8x128xf32> to vector<8x96xf32>
    %169 = arith.negf %168 : vector<8x96xf32>
    %170 = math.exp %169 : vector<8x96xf32>
    %cst_30 = arith.constant 1.000000e+00 : f32
    %171 = vector.broadcast %cst_30 : f32 to vector<8x96xf32>
    %172 = arith.addf %171, %170 : vector<8x96xf32>
    %173 = arith.divf %171, %172 : vector<8x96xf32>
    %174 = vector.extract_strided_slice %167 {offsets = [0, 96], sizes = [8, 32], strides = [1, 1]} : vector<8x128xf32> to vector<8x32xf32>
    %175 = math.tanh %174 : vector<8x32xf32>
    %176 = vector.extract_strided_slice %173 {offsets = [0, 0], sizes = [8, 32], strides = [1, 1]} : vector<8x96xf32> to vector<8x32xf32>
    %177 = vector.extract_strided_slice %173 {offsets = [0, 32], sizes = [8, 32], strides = [1, 1]} : vector<8x96xf32> to vector<8x32xf32>
    %178 = vector.extract_strided_slice %173 {offsets = [0, 64], sizes = [8, 32], strides = [1, 1]} : vector<8x96xf32> to vector<8x32xf32>
    %179 = arith.mulf %177, %137 : vector<8x32xf32>
    %180 = arith.mulf %176, %175 : vector<8x32xf32>
    %181 = arith.addf %179, %180 : vector<8x32xf32>
    %182 = math.tanh %181 : vector<8x32xf32>
    %183 = arith.mulf %178, %182 : vector<8x32xf32>
    %184 = vector.extract_strided_slice %3 {offsets = [0, 128], sizes = [8, 128], strides = [1, 1]} : vector<8x256xf32> to vector<8x128xf32>
    %185 = arith.addf %162, %184 : vector<8x128xf32>
    %186 = vector.extract_strided_slice %161 {offsets = [0, 128], sizes = [8, 128], strides = [1, 1]} : vector<8x256xf32> to vector<8x128xf32>
    %187 = arith.addf %185, %186 : vector<8x128xf32>
    %188 = vector.extract_strided_slice %187 {offsets = [0, 0], sizes = [8, 96], strides = [1, 1]} : vector<8x128xf32> to vector<8x96xf32>
    %189 = arith.negf %188 : vector<8x96xf32>
    %190 = math.exp %189 : vector<8x96xf32>
    %cst_31 = arith.constant 1.000000e+00 : f32
    %191 = vector.broadcast %cst_31 : f32 to vector<8x96xf32>
    %192 = arith.addf %191, %190 : vector<8x96xf32>
    %193 = arith.divf %191, %192 : vector<8x96xf32>
    %194 = vector.extract_strided_slice %187 {offsets = [0, 96], sizes = [8, 32], strides = [1, 1]} : vector<8x128xf32> to vector<8x32xf32>
    %195 = math.tanh %194 : vector<8x32xf32>
    %196 = vector.extract_strided_slice %193 {offsets = [0, 0], sizes = [8, 32], strides = [1, 1]} : vector<8x96xf32> to vector<8x32xf32>
    %197 = vector.extract_strided_slice %193 {offsets = [0, 32], sizes = [8, 32], strides = [1, 1]} : vector<8x96xf32> to vector<8x32xf32>
    %198 = vector.extract_strided_slice %193 {offsets = [0, 64], sizes = [8, 32], strides = [1, 1]} : vector<8x96xf32> to vector<8x32xf32>
    %199 = arith.mulf %197, %157 : vector<8x32xf32>
    %200 = arith.mulf %196, %195 : vector<8x32xf32>
    %201 = arith.addf %199, %200 : vector<8x32xf32>
    %202 = math.tanh %201 : vector<8x32xf32>
    %203 = arith.mulf %198, %202 : vector<8x32xf32>
    %c24 = arith.constant 24 : index
    %c0_32 = arith.constant 0 : index
    %204 = vector.load %arg5[%c24, %c0_32] : memref<64x32xf32, #tpu.memory_space<vmem>>, vector<8x32xf32>
    tpu.vector_store %arg5[%c24, %c0_32], %203 {strides = array<i32>} : memref<64x32xf32, #tpu.memory_space<vmem>>, vector<8x32xf32>,
    %cst_33 = arith.constant dense<0.000000e+00> : vector<8x256xf32>
    %205 = tpu.matmul %183, %4, %cst_33 {dimension_numbers = #tpu.dot_dimension_numbers<[1], [0], [0], [1], [0, 0, 1, 1], [], []>} : vector<8x32xf32>, vector<32x256xf32>, vector<8x256xf32> -> vector<8x256xf32>
    %cst_34 = arith.constant dense<0.000000e+00> : vector<8x128xf32>
    %206 = tpu.matmul %203, %5, %cst_34 {dimension_numbers = #tpu.dot_dimension_numbers<[1], [0], [0], [1], [0, 0, 1, 1], [], []>} : vector<8x32xf32>, vector<32x128xf32>, vector<8x128xf32> -> vector<8x128xf32>
    %207 = vector.extract_strided_slice %205 {offsets = [0, 0], sizes = [8, 128], strides = [1, 1]} : vector<8x256xf32> to vector<8x128xf32>
    %208 = vector.extract_strided_slice %3 {offsets = [0, 0], sizes = [8, 128], strides = [1, 1]} : vector<8x256xf32> to vector<8x128xf32>
    %209 = arith.addf %207, %208 : vector<8x128xf32>
    %210 = vector.extract_strided_slice %2 {offsets = [40, 0], sizes = [8, 128], strides = [1, 1]} : vector<64x128xf32> to vector<8x128xf32>
    %211 = arith.addf %209, %210 : vector<8x128xf32>
    %212 = vector.extract_strided_slice %211 {offsets = [0, 0], sizes = [8, 96], strides = [1, 1]} : vector<8x128xf32> to vector<8x96xf32>
    %213 = arith.negf %212 : vector<8x96xf32>
    %214 = math.exp %213 : vector<8x96xf32>
    %cst_35 = arith.constant 1.000000e+00 : f32
    %215 = vector.broadcast %cst_35 : f32 to vector<8x96xf32>
    %216 = arith.addf %215, %214 : vector<8x96xf32>
    %217 = arith.divf %215, %216 : vector<8x96xf32>
    %218 = vector.extract_strided_slice %211 {offsets = [0, 96], sizes = [8, 32], strides = [1, 1]} : vector<8x128xf32> to vector<8x32xf32>
    %219 = math.tanh %218 : vector<8x32xf32>
    %220 = vector.extract_strided_slice %217 {offsets = [0, 0], sizes = [8, 32], strides = [1, 1]} : vector<8x96xf32> to vector<8x32xf32>
    %221 = vector.extract_strided_slice %217 {offsets = [0, 32], sizes = [8, 32], strides = [1, 1]} : vector<8x96xf32> to vector<8x32xf32>
    %222 = vector.extract_strided_slice %217 {offsets = [0, 64], sizes = [8, 32], strides = [1, 1]} : vector<8x96xf32> to vector<8x32xf32>
    %223 = arith.mulf %221, %181 : vector<8x32xf32>
    %224 = arith.mulf %220, %219 : vector<8x32xf32>
    %225 = arith.addf %223, %224 : vector<8x32xf32>
    %226 = math.tanh %225 : vector<8x32xf32>
    %227 = arith.mulf %222, %226 : vector<8x32xf32>
    %228 = vector.extract_strided_slice %3 {offsets = [0, 128], sizes = [8, 128], strides = [1, 1]} : vector<8x256xf32> to vector<8x128xf32>
    %229 = arith.addf %206, %228 : vector<8x128xf32>
    %230 = vector.extract_strided_slice %205 {offsets = [0, 128], sizes = [8, 128], strides = [1, 1]} : vector<8x256xf32> to vector<8x128xf32>
    %231 = arith.addf %229, %230 : vector<8x128xf32>
    %232 = vector.extract_strided_slice %231 {offsets = [0, 0], sizes = [8, 96], strides = [1, 1]} : vector<8x128xf32> to vector<8x96xf32>
    %233 = arith.negf %232 : vector<8x96xf32>
    %234 = math.exp %233 : vector<8x96xf32>
    %cst_36 = arith.constant 1.000000e+00 : f32
    %235 = vector.broadcast %cst_36 : f32 to vector<8x96xf32>
    %236 = arith.addf %235, %234 : vector<8x96xf32>
    %237 = arith.divf %235, %236 : vector<8x96xf32>
    %238 = vector.extract_strided_slice %231 {offsets = [0, 96], sizes = [8, 32], strides = [1, 1]} : vector<8x128xf32> to vector<8x32xf32>
    %239 = math.tanh %238 : vector<8x32xf32>
    %240 = vector.extract_strided_slice %237 {offsets = [0, 0], sizes = [8, 32], strides = [1, 1]} : vector<8x96xf32> to vector<8x32xf32>
    %241 = vector.extract_strided_slice %237 {offsets = [0, 32], sizes = [8, 32], strides = [1, 1]} : vector<8x96xf32> to vector<8x32xf32>
    %242 = vector.extract_strided_slice %237 {offsets = [0, 64], sizes = [8, 32], strides = [1, 1]} : vector<8x96xf32> to vector<8x32xf32>
    %243 = arith.mulf %241, %201 : vector<8x32xf32>
    %244 = arith.mulf %240, %239 : vector<8x32xf32>
    %245 = arith.addf %243, %244 : vector<8x32xf32>
    %246 = math.tanh %245 : vector<8x32xf32>
    %247 = arith.mulf %242, %246 : vector<8x32xf32>
    %c32 = arith.constant 32 : index
    %c0_37 = arith.constant 0 : index
    %248 = vector.load %arg5[%c32, %c0_37] : memref<64x32xf32, #tpu.memory_space<vmem>>, vector<8x32xf32>
    tpu.vector_store %arg5[%c32, %c0_37], %247 {strides = array<i32>} : memref<64x32xf32, #tpu.memory_space<vmem>>, vector<8x32xf32>,
    %cst_38 = arith.constant dense<0.000000e+00> : vector<8x256xf32>
    %249 = tpu.matmul %227, %4, %cst_38 {dimension_numbers = #tpu.dot_dimension_numbers<[1], [0], [0], [1], [0, 0, 1, 1], [], []>} : vector<8x32xf32>, vector<32x256xf32>, vector<8x256xf32> -> vector<8x256xf32>
    %cst_39 = arith.constant dense<0.000000e+00> : vector<8x128xf32>
    %250 = tpu.matmul %247, %5, %cst_39 {dimension_numbers = #tpu.dot_dimension_numbers<[1], [0], [0], [1], [0, 0, 1, 1], [], []>} : vector<8x32xf32>, vector<32x128xf32>, vector<8x128xf32> -> vector<8x128xf32>
    %251 = vector.extract_strided_slice %249 {offsets = [0, 0], sizes = [8, 128], strides = [1, 1]} : vector<8x256xf32> to vector<8x128xf32>
    %252 = vector.extract_strided_slice %3 {offsets = [0, 0], sizes = [8, 128], strides = [1, 1]} : vector<8x256xf32> to vector<8x128xf32>
    %253 = arith.addf %251, %252 : vector<8x128xf32>
    %254 = vector.extract_strided_slice %2 {offsets = [48, 0], sizes = [8, 128], strides = [1, 1]} : vector<64x128xf32> to vector<8x128xf32>
    %255 = arith.addf %253, %254 : vector<8x128xf32>
    %256 = vector.extract_strided_slice %255 {offsets = [0, 0], sizes = [8, 96], strides = [1, 1]} : vector<8x128xf32> to vector<8x96xf32>
    %257 = arith.negf %256 : vector<8x96xf32>
    %258 = math.exp %257 : vector<8x96xf32>
    %cst_40 = arith.constant 1.000000e+00 : f32
    %259 = vector.broadcast %cst_40 : f32 to vector<8x96xf32>
    %260 = arith.addf %259, %258 : vector<8x96xf32>
    %261 = arith.divf %259, %260 : vector<8x96xf32>
    %262 = vector.extract_strided_slice %255 {offsets = [0, 96], sizes = [8, 32], strides = [1, 1]} : vector<8x128xf32> to vector<8x32xf32>
    %263 = math.tanh %262 : vector<8x32xf32>
    %264 = vector.extract_strided_slice %261 {offsets = [0, 0], sizes = [8, 32], strides = [1, 1]} : vector<8x96xf32> to vector<8x32xf32>
    %265 = vector.extract_strided_slice %261 {offsets = [0, 32], sizes = [8, 32], strides = [1, 1]} : vector<8x96xf32> to vector<8x32xf32>
    %266 = vector.extract_strided_slice %261 {offsets = [0, 64], sizes = [8, 32], strides = [1, 1]} : vector<8x96xf32> to vector<8x32xf32>
    %267 = arith.mulf %265, %225 : vector<8x32xf32>
    %268 = arith.mulf %264, %263 : vector<8x32xf32>
    %269 = arith.addf %267, %268 : vector<8x32xf32>
    %270 = math.tanh %269 : vector<8x32xf32>
    %271 = arith.mulf %266, %270 : vector<8x32xf32>
    %272 = vector.extract_strided_slice %3 {offsets = [0, 128], sizes = [8, 128], strides = [1, 1]} : vector<8x256xf32> to vector<8x128xf32>
    %273 = arith.addf %250, %272 : vector<8x128xf32>
    %274 = vector.extract_strided_slice %249 {offsets = [0, 128], sizes = [8, 128], strides = [1, 1]} : vector<8x256xf32> to vector<8x128xf32>
    %275 = arith.addf %273, %274 : vector<8x128xf32>
    %276 = vector.extract_strided_slice %275 {offsets = [0, 0], sizes = [8, 96], strides = [1, 1]} : vector<8x128xf32> to vector<8x96xf32>
    %277 = arith.negf %276 : vector<8x96xf32>
    %278 = math.exp %277 : vector<8x96xf32>
    %cst_41 = arith.constant 1.000000e+00 : f32
    %279 = vector.broadcast %cst_41 : f32 to vector<8x96xf32>
    %280 = arith.addf %279, %278 : vector<8x96xf32>
    %281 = arith.divf %279, %280 : vector<8x96xf32>
    %282 = vector.extract_strided_slice %275 {offsets = [0, 96], sizes = [8, 32], strides = [1, 1]} : vector<8x128xf32> to vector<8x32xf32>
    %283 = math.tanh %282 : vector<8x32xf32>
    %284 = vector.extract_strided_slice %281 {offsets = [0, 0], sizes = [8, 32], strides = [1, 1]} : vector<8x96xf32> to vector<8x32xf32>
    %285 = vector.extract_strided_slice %281 {offsets = [0, 32], sizes = [8, 32], strides = [1, 1]} : vector<8x96xf32> to vector<8x32xf32>
    %286 = vector.extract_strided_slice %281 {offsets = [0, 64], sizes = [8, 32], strides = [1, 1]} : vector<8x96xf32> to vector<8x32xf32>
    %287 = arith.mulf %285, %245 : vector<8x32xf32>
    %288 = arith.mulf %284, %283 : vector<8x32xf32>
    %289 = arith.addf %287, %288 : vector<8x32xf32>
    %290 = math.tanh %289 : vector<8x32xf32>
    %291 = arith.mulf %286, %290 : vector<8x32xf32>
    %c40 = arith.constant 40 : index
    %c0_42 = arith.constant 0 : index
    %292 = vector.load %arg5[%c40, %c0_42] : memref<64x32xf32, #tpu.memory_space<vmem>>, vector<8x32xf32>
    tpu.vector_store %arg5[%c40, %c0_42], %291 {strides = array<i32>} : memref<64x32xf32, #tpu.memory_space<vmem>>, vector<8x32xf32>,
    %cst_43 = arith.constant dense<0.000000e+00> : vector<8x256xf32>
    %293 = tpu.matmul %271, %4, %cst_43 {dimension_numbers = #tpu.dot_dimension_numbers<[1], [0], [0], [1], [0, 0, 1, 1], [], []>} : vector<8x32xf32>, vector<32x256xf32>, vector<8x256xf32> -> vector<8x256xf32>
    %cst_44 = arith.constant dense<0.000000e+00> : vector<8x128xf32>
    %294 = tpu.matmul %291, %5, %cst_44 {dimension_numbers = #tpu.dot_dimension_numbers<[1], [0], [0], [1], [0, 0, 1, 1], [], []>} : vector<8x32xf32>, vector<32x128xf32>, vector<8x128xf32> -> vector<8x128xf32>
    %295 = vector.extract_strided_slice %293 {offsets = [0, 0], sizes = [8, 128], strides = [1, 1]} : vector<8x256xf32> to vector<8x128xf32>
    %296 = vector.extract_strided_slice %3 {offsets = [0, 0], sizes = [8, 128], strides = [1, 1]} : vector<8x256xf32> to vector<8x128xf32>
    %297 = arith.addf %295, %296 : vector<8x128xf32>
    %298 = vector.extract_strided_slice %2 {offsets = [56, 0], sizes = [8, 128], strides = [1, 1]} : vector<64x128xf32> to vector<8x128xf32>
    %299 = arith.addf %297, %298 : vector<8x128xf32>
    %300 = vector.extract_strided_slice %299 {offsets = [0, 0], sizes = [8, 96], strides = [1, 1]} : vector<8x128xf32> to vector<8x96xf32>
    %301 = arith.negf %300 : vector<8x96xf32>
    %302 = math.exp %301 : vector<8x96xf32>
    %cst_45 = arith.constant 1.000000e+00 : f32
    %303 = vector.broadcast %cst_45 : f32 to vector<8x96xf32>
    %304 = arith.addf %303, %302 : vector<8x96xf32>
    %305 = arith.divf %303, %304 : vector<8x96xf32>
    %306 = vector.extract_strided_slice %299 {offsets = [0, 96], sizes = [8, 32], strides = [1, 1]} : vector<8x128xf32> to vector<8x32xf32>
    %307 = math.tanh %306 : vector<8x32xf32>
    %308 = vector.extract_strided_slice %305 {offsets = [0, 0], sizes = [8, 32], strides = [1, 1]} : vector<8x96xf32> to vector<8x32xf32>
    %309 = vector.extract_strided_slice %305 {offsets = [0, 32], sizes = [8, 32], strides = [1, 1]} : vector<8x96xf32> to vector<8x32xf32>
    %310 = vector.extract_strided_slice %305 {offsets = [0, 64], sizes = [8, 32], strides = [1, 1]} : vector<8x96xf32> to vector<8x32xf32>
    %311 = arith.mulf %309, %269 : vector<8x32xf32>
    %312 = arith.mulf %308, %307 : vector<8x32xf32>
    %313 = arith.addf %311, %312 : vector<8x32xf32>
    %314 = math.tanh %313 : vector<8x32xf32>
    %315 = arith.mulf %310, %314 : vector<8x32xf32>
    %316 = vector.extract_strided_slice %3 {offsets = [0, 128], sizes = [8, 128], strides = [1, 1]} : vector<8x256xf32> to vector<8x128xf32>
    %317 = arith.addf %294, %316 : vector<8x128xf32>
    %318 = vector.extract_strided_slice %293 {offsets = [0, 128], sizes = [8, 128], strides = [1, 1]} : vector<8x256xf32> to vector<8x128xf32>
    %319 = arith.addf %317, %318 : vector<8x128xf32>
    %320 = vector.extract_strided_slice %319 {offsets = [0, 0], sizes = [8, 96], strides = [1, 1]} : vector<8x128xf32> to vector<8x96xf32>
    %321 = arith.negf %320 : vector<8x96xf32>
    %322 = math.exp %321 : vector<8x96xf32>
    %cst_46 = arith.constant 1.000000e+00 : f32
    %323 = vector.broadcast %cst_46 : f32 to vector<8x96xf32>
    %324 = arith.addf %323, %322 : vector<8x96xf32>
    %325 = arith.divf %323, %324 : vector<8x96xf32>
    %326 = vector.extract_strided_slice %319 {offsets = [0, 96], sizes = [8, 32], strides = [1, 1]} : vector<8x128xf32> to vector<8x32xf32>
    %327 = math.tanh %326 : vector<8x32xf32>
    %328 = vector.extract_strided_slice %325 {offsets = [0, 0], sizes = [8, 32], strides = [1, 1]} : vector<8x96xf32> to vector<8x32xf32>
    %329 = vector.extract_strided_slice %325 {offsets = [0, 32], sizes = [8, 32], strides = [1, 1]} : vector<8x96xf32> to vector<8x32xf32>
    %330 = vector.extract_strided_slice %325 {offsets = [0, 64], sizes = [8, 32], strides = [1, 1]} : vector<8x96xf32> to vector<8x32xf32>
    %331 = arith.mulf %329, %289 : vector<8x32xf32>
    %332 = arith.mulf %328, %327 : vector<8x32xf32>
    %333 = arith.addf %331, %332 : vector<8x32xf32>
    %334 = math.tanh %333 : vector<8x32xf32>
    %335 = arith.mulf %330, %334 : vector<8x32xf32>
    %c48 = arith.constant 48 : index
    %c0_47 = arith.constant 0 : index
    %336 = vector.load %arg5[%c48, %c0_47] : memref<64x32xf32, #tpu.memory_space<vmem>>, vector<8x32xf32>
    tpu.vector_store %arg5[%c48, %c0_47], %335 {strides = array<i32>} : memref<64x32xf32, #tpu.memory_space<vmem>>, vector<8x32xf32>,
    %cst_48 = arith.constant dense<0.000000e+00> : vector<8x256xf32>
    %337 = tpu.matmul %315, %4, %cst_48 {dimension_numbers = #tpu.dot_dimension_numbers<[1], [0], [0], [1], [0, 0, 1, 1], [], []>} : vector<8x32xf32>, vector<32x256xf32>, vector<8x256xf32> -> vector<8x256xf32>
    %cst_49 = arith.constant dense<0.000000e+00> : vector<8x128xf32>
    %338 = tpu.matmul %335, %5, %cst_49 {dimension_numbers = #tpu.dot_dimension_numbers<[1], [0], [0], [1], [0, 0, 1, 1], [], []>} : vector<8x32xf32>, vector<32x128xf32>, vector<8x128xf32> -> vector<8x128xf32>
    %339 = vector.extract_strided_slice %3 {offsets = [0, 128], sizes = [8, 128], strides = [1, 1]} : vector<8x256xf32> to vector<8x128xf32>
    %340 = arith.addf %338, %339 : vector<8x128xf32>
    %341 = vector.extract_strided_slice %337 {offsets = [0, 128], sizes = [8, 128], strides = [1, 1]} : vector<8x256xf32> to vector<8x128xf32>
    %342 = arith.addf %340, %341 : vector<8x128xf32>
    %343 = vector.extract_strided_slice %342 {offsets = [0, 0], sizes = [8, 96], strides = [1, 1]} : vector<8x128xf32> to vector<8x96xf32>
    %344 = arith.negf %343 : vector<8x96xf32>
    %345 = math.exp %344 : vector<8x96xf32>
    %cst_50 = arith.constant 1.000000e+00 : f32
    %346 = vector.broadcast %cst_50 : f32 to vector<8x96xf32>
    %347 = arith.addf %346, %345 : vector<8x96xf32>
    %348 = arith.divf %346, %347 : vector<8x96xf32>
    %349 = vector.extract_strided_slice %342 {offsets = [0, 96], sizes = [8, 32], strides = [1, 1]} : vector<8x128xf32> to vector<8x32xf32>
    %350 = math.tanh %349 : vector<8x32xf32>
    %351 = vector.extract_strided_slice %348 {offsets = [0, 0], sizes = [8, 32], strides = [1, 1]} : vector<8x96xf32> to vector<8x32xf32>
    %352 = vector.extract_strided_slice %348 {offsets = [0, 32], sizes = [8, 32], strides = [1, 1]} : vector<8x96xf32> to vector<8x32xf32>
    %353 = vector.extract_strided_slice %348 {offsets = [0, 64], sizes = [8, 32], strides = [1, 1]} : vector<8x96xf32> to vector<8x32xf32>
    %354 = arith.mulf %352, %333 : vector<8x32xf32>
    %355 = arith.mulf %351, %350 : vector<8x32xf32>
    %356 = arith.addf %354, %355 : vector<8x32xf32>
    %357 = math.tanh %356 : vector<8x32xf32>
    %358 = arith.mulf %353, %357 : vector<8x32xf32>
    %c56 = arith.constant 56 : index
    %c0_51 = arith.constant 0 : index
    %359 = vector.load %arg5[%c56, %c0_51] : memref<64x32xf32, #tpu.memory_space<vmem>>, vector<8x32xf32>
    tpu.vector_store %arg5[%c56, %c0_51], %358 {strides = array<i32>} : memref<64x32xf32, #tpu.memory_space<vmem>>, vector<8x32xf32>,
    return
  }
}

</mosaic_0001>

<llo_original>
// kernel: tpu_custom_call.1
$region0: #{tpu_custom_call.1}
  #allocation0 [shape = 'u32[]', space=smem, size = 0x4, offset = 0x4, fixed_abs, tag = 'smem constant byte address 0x4 - core index']
  #allocation1 [shape = 'u32[72,128]{1,0:T(1,128)}', space=vmem, size = 0x9000, scoped, tag = 'internal scratch']
  %s0 = inlined_call_operand.vmem [shape: f32[64,10], index: 0, kind: input, shape index: {}]
  %s1 = inlined_call_operand.vmem [shape: f32[10,128], index: 1, kind: input, shape index: {}]
  %s2 = inlined_call_operand.hbm [shape: f32[8,256], index: 2, kind: input, shape index: {}]
  %s3 = inlined_call_operand.vmem [shape: f32[32,256], index: 3, kind: input, shape index: {}]
  %s4 = inlined_call_operand.hbm [shape: f32[32,128], index: 4, kind: input, shape index: {}]
  %s5 = inlined_call_operand.vmem [shape: f32[64,32], index: 5, kind: output, shape index: {}]
  %s6 = sld [smem:[#allocation0]]
  $region38: #{tpu_custom_call.1} parent=0
    _
  %s8 = ssub.s32 1, %s6
  %s9 = scalar_select 0, %s8, %s6
  $region1: #{tpu_custom_call.1} parent=0
    #allocation2 [shape = 'u8[8192]{0}', space=vmem, size = 0x2000, scoped, tag = 'input window, operand 2, single buffered']
    #allocation3 [shape = 's32[1]{0}', space=sflag, size = 0x4, scoped, tag = 'scoped memory for tpu_custom_call.1']
    #allocation4 [shape = 'u8[16384]{0}', space=vmem, size = 0x4000, scoped, tag = 'input window, operand 4, single buffered']
    #allocation5 [shape = 's32[1]{0}', space=sflag, size = 0x4, scoped, tag = 'scoped memory for tpu_custom_call.1']
    %10 = vsyncpa [#allocation3], 0
    %11 = vsyncpa [#allocation5], 0
    // Predicated region
    $region2: #{tpu_custom_call.1} parent=1 // pred_check
      _
    $region3: #{tpu_custom_call.1} parent=1 // pred_check_branch
      %13 = sbr.rel (0) target = $region5
    $region4: #{tpu_custom_call.1} parent=1 // pred_region
      _
    $region5: #{tpu_custom_call.1} parent=1 // pred_fallthru
      _
    // Predicated region
    $region6: #{tpu_custom_call.1} parent=1 // pred_check
      _
    $region7: #{tpu_custom_call.1} parent=1 // pred_check_branch
      %15 = sbr.rel (0) target = $region9
    $region8: #{tpu_custom_call.1} parent=1 // pred_region
      _
    $region9: #{tpu_custom_call.1} parent=1 // pred_fallthru
      _
    // Predicated region
    $region10: #{tpu_custom_call.1} parent=1 // pred_check
      _
    $region11: #{tpu_custom_call.1} parent=1 // pred_check_branch
      %17 = sbr.rel (0) target = $region13
    $region12: #{tpu_custom_call.1} parent=1 // pred_region
      %19 = vsyncadd [#allocation3], 0
      %s21 = sshll.u32 %s2, 4
      %s22 = int_to_ptr.hbm [resolvable:$true] %s21
      %s23 = sshll.u32 [#allocation2], 4
      %s24 = int_to_ptr.vmem [resolvable:$true] %s23
      %26 = dma.hbm_to_vmem [thread:$0]  %s22, 256, %s24, [#allocation3]
    $region13: #{tpu_custom_call.1} parent=1 // pred_fallthru
      _
    // Predicated region
    $region14: #{tpu_custom_call.1} parent=1 // pred_check
      _
    $region15: #{tpu_custom_call.1} parent=1 // pred_check_branch
      %28 = sbr.rel (0) target = $region17
    $region16: #{tpu_custom_call.1} parent=1 // pred_region
      _
    $region17: #{tpu_custom_call.1} parent=1 // pred_fallthru
      _
    // Predicated region
    $region18: #{tpu_custom_call.1} parent=1 // pred_check
      _
    $region19: #{tpu_custom_call.1} parent=1 // pred_check_branch
      %30 = sbr.rel (0) target = $region21
    $region20: #{tpu_custom_call.1} parent=1 // pred_region
      %32 = vsyncadd [#allocation5], 0
      %s33 = sshll.u32 %s4, 4
      %s34 = int_to_ptr.hbm [resolvable:$true] %s33
      %s35 = sshll.u32 [#allocation4], 4
      %s36 = int_to_ptr.vmem [resolvable:$true] %s35
      %41 = dma.hbm_to_vmem [thread:$0]  %s34, 512, %s36, [#allocation5], 128, 128, 8
    $region21: #{tpu_custom_call.1} parent=1 // pred_fallthru
      _
    // Predicated region
    $region22: #{tpu_custom_call.1} parent=1 // pred_check
      _
    $region23: #{tpu_custom_call.1} parent=1 // pred_check_branch
      %43 = sbr.rel (0) target = $region25
    $region24: #{tpu_custom_call.1} parent=1 // pred_region
      %45 = dma.done [#allocation3], 256
    $region25: #{tpu_custom_call.1} parent=1 // pred_fallthru
      _
    // Predicated region
    $region26: #{tpu_custom_call.1} parent=1 // pred_check
      _
    $region27: #{tpu_custom_call.1} parent=1 // pred_check_branch
      %47 = sbr.rel (0) target = $region29
    $region28: #{tpu_custom_call.1} parent=1 // pred_region
      %49 = dma.done [#allocation5], 512
    $region29: #{tpu_custom_call.1} parent=1 // pred_fallthru
      _
    %v50 = vld [vmem:[%s0] sm:$0xff]
    %v51 = vld [vmem:[%s0 + $0x8] sm:$0xff]
    %v52 = vld [vmem:[%s0 + $0x10] sm:$0xff]
    %v53 = vld [vmem:[%s0 + $0x18] sm:$0xff]
    %v54 = vld [vmem:[%s0 + $0x20] sm:$0xff]
    %v55 = vld [vmem:[%s0 + $0x28] sm:$0xff]
    %v56 = vld [vmem:[%s0 + $0x30] sm:$0xff]
    %v57 = vld [vmem:[%s0 + $0x38] sm:$0xff]
    %v58 = vld [vmem:[%s1] sm:$0xff]
    %v59 = vld [vmem:[%s1 + $0x8] sm:$0x3]
    %vm60 = vcmask 80896
    %v62 = vsel %vm60, %v50, 0
    %v65 = vsel %vm60, %v51, 0
    %v68 = vsel %vm60, %v52, 0
    %v71 = vsel %vm60, %v53, 0
    %v74 = vsel %vm60, %v54, 0
    %v77 = vsel %vm60, %v55, 0
    %v80 = vsel %vm60, %v56, 0
    %v83 = vsel %vm60, %v57, 0
    %vm85 = vcmask 1041408
    %v87 = vsel %vm85, %v59, 0
    %89 = vmatpush.msra.mxu0 0.0
    %90 = vmatpush.msra.mxu0 0.0
    %91 = vmatpush.msra.mxu0 0.0
    %92 = vmatpush.msra.mxu0 0.0
    %93 = vmatpush.msra.mxu0 0.0
    %94 = vmatpush.msra.mxu0 0.0
    %95 = vmatpush.msra.mxu0 0.0
    %96 = vmatpush.msra.mxu0 0.0
    %97 = vmatpush.msra.mxu0 0.0
    %98 = vmatpush.msra.mxu0 0.0
    %99 = vmatpush.msra.mxu0 0.0
    %100 = vmatpush.msra.mxu0 0.0
    %101 = vmatpush.msra.mxu0 0.0
    %102 = vmatpush.msra.mxu0 0.0
    %103 = vmatpush.msra.mxu0 %v87
    %104 = vmatpush.msra.mxu0 %v58
    %105 = vmatmul.f32.gmra.mxu0 %v62
    %v106 = vpop.f32.mrf.mxu0
    %v107 = vadd.f32 0.0, %v106
    %108 = vmatmul.f32.gmra.mxu0 %v65
    %v109 = vpop.f32.mrf.mxu0
    %v110 = vadd.f32 0.0, %v109
    %111 = vmatmul.f32.gmra.mxu0 %v68
    %v112 = vpop.f32.mrf.mxu0
    %v113 = vadd.f32 0.0, %v112
    %114 = vmatmul.f32.gmra.mxu0 %v71
    %v115 = vpop.f32.mrf.mxu0
    %v116 = vadd.f32 0.0, %v115
    %117 = vmatmul.f32.gmra.mxu0 %v74
    %v118 = vpop.f32.mrf.mxu0
    %v119 = vadd.f32 0.0, %v118
    %120 = vmatmul.f32.gmra.mxu0 %v77
    %v121 = vpop.f32.mrf.mxu0
    %v122 = vadd.f32 0.0, %v121
    %123 = vmatmul.f32.gmra.mxu0 %v80
    %v124 = vpop.f32.mrf.mxu0
    %v125 = vadd.f32 0.0, %v124
    %126 = vmatmul.f32.gmra.mxu0 %v83
    %v127 = vpop.f32.mrf.mxu0
    %v128 = vadd.f32 0.0, %v127
    %129 = vdwg.mxu0
    %v130 = vld [vmem:[#allocation2] sm:$0xff]
    %v131 = vld [vmem:[#allocation2 + $0x8] sm:$0xff]
    %v132 = vld [vmem:[%s3] sm:$0xff]
    %v133 = vld [vmem:[%s3 + $0x8] sm:$0xff]
    %v134 = vld [vmem:[%s3 + $0x10] sm:$0xff]
    %v135 = vld [vmem:[%s3 + $0x18] sm:$0xff]
    %v136 = vld [vmem:[%s3 + $0x20] sm:$0xff]
    %v137 = vld [vmem:[%s3 + $0x28] sm:$0xff]
    %v138 = vld [vmem:[%s3 + $0x30] sm:$0xff]
    %v139 = vld [vmem:[%s3 + $0x38] sm:$0xff]
    %v140 = vld [vmem:[#allocation4] sm:$0xff]
    %v141 = vld [vmem:[#allocation4 + $0x8] sm:$0xff]
    %v142 = vld [vmem:[#allocation4 + $0x10] sm:$0xff]
    %v143 = vld [vmem:[#allocation4 + $0x18] sm:$0xff]
    %vm144 = vcmask 261120
    %v146 = vsel %vm144, 0.0, 0
    %148 = vmatpush.msra.mxu0 0.0
    %149 = vmatpush.msra.mxu0 0.0
    %150 = vmatpush.msra.mxu0 0.0
    %151 = vmatpush.msra.mxu0 0.0
    %152 = vmatpush.msra.mxu0 0.0
    %153 = vmatpush.msra.mxu0 0.0
    %154 = vmatpush.msra.mxu0 0.0
    %155 = vmatpush.msra.mxu0 0.0
    %156 = vmatpush.msra.mxu0 0.0
    %157 = vmatpush.msra.mxu0 0.0
    %158 = vmatpush.msra.mxu0 0.0
    %159 = vmatpush.msra.mxu0 0.0
    %160 = vmatpush.msra.mxu0 %v138
    %161 = vmatpush.msra.mxu0 %v136
    %162 = vmatpush.msra.mxu0 %v134
    %163 = vmatpush.msra.mxu0 %v132
    %164 = vmatmul.f32.gmra.mxu0 %v146
    %v165 = vpop.f32.mrf.mxu0
    %v166 = vadd.f32 0.0, %v165
    %167 = vdwg.mxu0
    %v168 = vadd.f32 %v166, %v130
    %v169 = vadd.f32 %v168, %v107
    %v170 = vxor.u32 %v169, 2147483648
    %v171 = vmul.f32 %v170, 1.442695
    %v172 = vpow.pop %v171
    %v173 = vadd.f32 %v172, 1.0
    %v174 = vrcp.pop %v173
    %v175 = vmul.f32 %v173, %v174
    %v176 = vsub.f32 1.0, %v175
    %v177 = vmul.f32 %v174, %v176
    %v178 = vadd.f32 %v174, %v177
    %vm179 = vweird.f32 %v173
    %vm180 = vweird.f32 %v174
    %vm181 = vmor %vm179, %vm180
    %v182 = vsel %vm181, %v174, %v178
    %v183 = vand.u32 2147483647, %v173
    %vm184 = vcmp.eq.f32.partialorder %v183, 8.507059e+37
    %v185 = vand.u32 %v173, 2147483648
    %v186 = vor.u32 1.1754944e-38, %v185
    %v187 = vsel %vm184, %v186, %v182
    %v188 = vmul.f32 1.0, %v187
    %v189 = vtanh.pop %v169
    %v190 = vmul.f32 %v188, 0.0
    %192 = vrot.lane.b32.xlu0 %v189, 32
    %v193 = vpop.permute.xlu0 %192
    %v195 = vmul.f32 %v188, %v193
    %197 = vrot.lane.b32.xlu0 %v195, 32
    %v198 = vpop.permute.xlu0 %197
    %v200 = vadd.f32 %v190, %v198
    %v201 = vtanh.pop %v200
    %203 = vrot.lane.b32.xlu0 %v201, 32
    %v204 = vpop.permute.xlu0 %203
    %v206 = vmul.f32 %v188, %v204
    %208 = vrot.lane.b32.xlu0 %v206, 64
    %v209 = vpop.permute.xlu0 %208
    %v210 = vsel %vm144, %v209, 0
    %212 = vmatpush.msra.mxu0 0.0
    %213 = vmatpush.msra.mxu0 0.0
    %214 = vmatpush.msra.mxu0 0.0
    %215 = vmatpush.msra.mxu0 0.0
    %216 = vmatpush.msra.mxu0 0.0
    %217 = vmatpush.msra.mxu0 0.0
    %218 = vmatpush.msra.mxu0 0.0
    %219 = vmatpush.msra.mxu0 0.0
    %220 = vmatpush.msra.mxu0 0.0
    %221 = vmatpush.msra.mxu0 0.0
    %222 = vmatpush.msra.mxu0 0.0
    %223 = vmatpush.msra.mxu0 0.0
    %224 = vmatpush.msra.mxu0 %v138
    %225 = vmatpush.msra.mxu0 %v136
    %226 = vmatpush.msra.mxu0 %v134
    %227 = vmatpush.msra.mxu0 %v132
    %228 = vmatmul.f32.gmra.mxu0 %v210
    %v229 = vpop.f32.mrf.mxu0
    %v230 = vadd.f32 0.0, %v229
    %231 = vdwg.mxu0
    %232 = vmatpush.msra.mxu0 0.0
    %233 = vmatpush.msra.mxu0 0.0
    %234 = vmatpush.msra.mxu0 0.0
    %235 = vmatpush.msra.mxu0 0.0
    %236 = vmatpush.msra.mxu0 0.0
    %237 = vmatpush.msra.mxu0 0.0
    %238 = vmatpush.msra.mxu0 0.0
    %239 = vmatpush.msra.mxu0 0.0
    %240 = vmatpush.msra.mxu0 0.0
    %241 = vmatpush.msra.mxu0 0.0
    %242 = vmatpush.msra.mxu0 0.0
    %243 = vmatpush.msra.mxu0 0.0
    %244 = vmatpush.msra.mxu0 %v139
    %245 = vmatpush.msra.mxu0 %v137
    %246 = vmatpush.msra.mxu0 %v135
    %247 = vmatpush.msra.mxu0 %v133
    %248 = vmatmul.f32.gmra.mxu0 %v210
    %v249 = vpop.f32.mrf.mxu0
    %v250 = vadd.f32 0.0, %v249
    %251 = vdwg.mxu0
    %v252 = vadd.f32 %v230, %v130
    %v253 = vadd.f32 %v252, %v110
    %v254 = vxor.u32 %v253, 2147483648
    %v255 = vmul.f32 %v254, 1.442695
    %v256 = vpow.pop %v255
    %v257 = vadd.f32 %v256, 1.0
    %v258 = vrcp.pop %v257
    %v259 = vmul.f32 %v257, %v258
    %v260 = vsub.f32 1.0, %v259
    %v261 = vmul.f32 %v258, %v260
    %v262 = vadd.f32 %v258, %v261
    %vm263 = vweird.f32 %v257
    %vm264 = vweird.f32 %v258
    %vm265 = vmor %vm263, %vm264
    %v266 = vsel %vm265, %v258, %v262
    %v267 = vand.u32 2147483647, %v257
    %vm268 = vcmp.eq.f32.partialorder %v267, 8.507059e+37
    %v269 = vand.u32 %v257, 2147483648
    %v270 = vor.u32 1.1754944e-38, %v269
    %v271 = vsel %vm268, %v270, %v266
    %v272 = vmul.f32 1.0, %v271
    %v273 = vtanh.pop %v253
    %v274 = vmul.f32 %v272, %v200
    %276 = vrot.lane.b32.xlu0 %v273, 32
    %v277 = vpop.permute.xlu0 %276
    %v279 = vmul.f32 %v272, %v277
    %281 = vrot.lane.b32.xlu0 %v279, 32
    %v282 = vpop.permute.xlu0 %281
    %v284 = vadd.f32 %v274, %v282
    %v285 = vtanh.pop %v284
    %287 = vrot.lane.b32.xlu0 %v285, 32
    %v288 = vpop.permute.xlu0 %287
    %v290 = vmul.f32 %v272, %v288
    %291 = vmatpush.msra.mxu0 0.0
    %292 = vmatpush.msra.mxu0 0.0
    %293 = vmatpush.msra.mxu0 0.0
    %294 = vmatpush.msra.mxu0 0.0
    %295 = vmatpush.msra.mxu0 0.0
    %296 = vmatpush.msra.mxu0 0.0
    %297 = vmatpush.msra.mxu0 0.0
    %298 = vmatpush.msra.mxu0 0.0
    %299 = vmatpush.msra.mxu0 0.0
    %300 = vmatpush.msra.mxu0 0.0
    %301 = vmatpush.msra.mxu0 0.0
    %302 = vmatpush.msra.mxu0 0.0
    %303 = vmatpush.msra.mxu0 %v143
    %304 = vmatpush.msra.mxu0 %v142
    %305 = vmatpush.msra.mxu0 %v141
    %306 = vmatpush.msra.mxu0 %v140
    %307 = vmatmul.f32.gmra.mxu0 %v146
    %v308 = vpop.f32.mrf.mxu0
    %v309 = vadd.f32 %v131, %v308
    %310 = vdwg.mxu0
    %v311 = vadd.f32 %v309, %v250
    %v312 = vxor.u32 %v311, 2147483648
    %v313 = vmul.f32 %v312, 1.442695
    %v314 = vpow.pop %v313
    %v315 = vadd.f32 %v314, 1.0
    %v316 = vrcp.pop %v315
    %v317 = vmul.f32 %v315, %v316
    %v318 = vsub.f32 1.0, %v317
    %v319 = vmul.f32 %v316, %v318
    %v320 = vadd.f32 %v316, %v319
    %vm321 = vweird.f32 %v315
    %vm322 = vweird.f32 %v316
    %vm323 = vmor %vm321, %vm322
    %v324 = vsel %vm323, %v316, %v320
    %v325 = vand.u32 2147483647, %v315
    %vm326 = vcmp.eq.f32.partialorder %v325, 8.507059e+37
    %v327 = vand.u32 %v315, 2147483648
    %v328 = vor.u32 1.1754944e-38, %v327
    %v329 = vsel %vm326, %v328, %v324
    %v330 = vmul.f32 1.0, %v329
    %v331 = vtanh.pop %v311
    %v332 = vmul.f32 %v330, 0.0
    %334 = vrot.lane.b32.xlu0 %v331, 32
    %v335 = vpop.permute.xlu0 %334
    %v337 = vmul.f32 %v330, %v335
    %339 = vrot.lane.b32.xlu0 %v337, 32
    %v340 = vpop.permute.xlu0 %339
    %v342 = vadd.f32 %v332, %v340
    %v343 = vtanh.pop %v342
    %345 = vrot.lane.b32.xlu0 %v343, 32
    %v346 = vpop.permute.xlu0 %345
    %v348 = vmul.f32 %v330, %v346
    %350 = vrot.lane.b32.xlu0 %v348, 64
    %v351 = vpop.permute.xlu0 %350
    %353 = vst.msk [vmem:[%s5] sm:$0xff] %vm144, %v351
    %355 = vrot.lane.b32.xlu0 %v290, 64
    %v356 = vpop.permute.xlu0 %355
    %v357 = vsel %vm144, %v356, 0
    %359 = vmatpush.msra.mxu0 0.0
    %360 = vmatpush.msra.mxu0 0.0
    %361 = vmatpush.msra.mxu0 0.0
    %362 = vmatpush.msra.mxu0 0.0
    %363 = vmatpush.msra.mxu0 0.0
    %364 = vmatpush.msra.mxu0 0.0
    %365 = vmatpush.msra.mxu0 0.0
    %366 = vmatpush.msra.mxu0 0.0
    %367 = vmatpush.msra.mxu0 0.0
    %368 = vmatpush.msra.mxu0 0.0
    %369 = vmatpush.msra.mxu0 0.0
    %370 = vmatpush.msra.mxu0 0.0
    %371 = vmatpush.msra.mxu0 %v138
    %372 = vmatpush.msra.mxu0 %v136
    %373 = vmatpush.msra.mxu0 %v134
    %374 = vmatpush.msra.mxu0 %v132
    %375 = vmatmul.f32.gmra.mxu0 %v357
    %v376 = vpop.f32.mrf.mxu0
    %v377 = vadd.f32 0.0, %v376
    %378 = vdwg.mxu0
    %379 = vmatpush.msra.mxu0 0.0
    %380 = vmatpush.msra.mxu0 0.0
    %381 = vmatpush.msra.mxu0 0.0
    %382 = vmatpush.msra.mxu0 0.0
    %383 = vmatpush.msra.mxu0 0.0
    %384 = vmatpush.msra.mxu0 0.0
    %385 = vmatpush.msra.mxu0 0.0
    %386 = vmatpush.msra.mxu0 0.0
    %387 = vmatpush.msra.mxu0 0.0
    %388 = vmatpush.msra.mxu0 0.0
    %389 = vmatpush.msra.mxu0 0.0
    %390 = vmatpush.msra.mxu0 0.0
    %391 = vmatpush.msra.mxu0 %v139
    %392 = vmatpush.msra.mxu0 %v137
    %393 = vmatpush.msra.mxu0 %v135
    %394 = vmatpush.msra.mxu0 %v133
    %395 = vmatmul.f32.gmra.mxu0 %v357
    %v396 = vpop.f32.mrf.mxu0
    %v397 = vadd.f32 0.0, %v396
    %398 = vdwg.mxu0
    %v399 = vadd.f32 %v377, %v130
    %v400 = vadd.f32 %v399, %v113
    %v401 = vxor.u32 %v400, 2147483648
    %v402 = vmul.f32 %v401, 1.442695
    %v403 = vpow.pop %v402
    %v404 = vadd.f32 %v403, 1.0
    %v405 = vrcp.pop %v404
    %v406 = vmul.f32 %v404, %v405
    %v407 = vsub.f32 1.0, %v406
    %v408 = vmul.f32 %v405, %v407
    %v409 = vadd.f32 %v405, %v408
    %vm410 = vweird.f32 %v404
    %vm411 = vweird.f32 %v405
    %vm412 = vmor %vm410, %vm411
    %v413 = vsel %vm412, %v405, %v409
    %v414 = vand.u32 2147483647, %v404
    %vm415 = vcmp.eq.f32.partialorder %v414, 8.507059e+37
    %v416 = vand.u32 %v404, 2147483648
    %v417 = vor.u32 1.1754944e-38, %v416
    %v418 = vsel %vm415, %v417, %v413
    %v419 = vmul.f32 1.0, %v418
    %v420 = vtanh.pop %v400
    %v421 = vmul.f32 %v419, %v284
    %423 = vrot.lane.b32.xlu0 %v420, 32
    %v424 = vpop.permute.xlu0 %423
    %v426 = vmul.f32 %v419, %v424
    %428 = vrot.lane.b32.xlu0 %v426, 32
    %v429 = vpop.permute.xlu0 %428
    %v431 = vadd.f32 %v421, %v429
    %v432 = vtanh.pop %v431
    %434 = vrot.lane.b32.xlu0 %v432, 32
    %v435 = vpop.permute.xlu0 %434
    %v437 = vmul.f32 %v419, %v435
    %v438 = vsel %vm144, %v351, 0
    %440 = vmatpush.msra.mxu0 0.0
    %441 = vmatpush.msra.mxu0 0.0
    %442 = vmatpush.msra.mxu0 0.0
    %443 = vmatpush.msra.mxu0 0.0
    %444 = vmatpush.msra.mxu0 0.0
    %445 = vmatpush.msra.mxu0 0.0
    %446 = vmatpush.msra.mxu0 0.0
    %447 = vmatpush.msra.mxu0 0.0
    %448 = vmatpush.msra.mxu0 0.0
    %449 = vmatpush.msra.mxu0 0.0
    %450 = vmatpush.msra.mxu0 0.0
    %451 = vmatpush.msra.mxu0 0.0
    %452 = vmatpush.msra.mxu0 %v143
    %453 = vmatpush.msra.mxu0 %v142
    %454 = vmatpush.msra.mxu0 %v141
    %455 = vmatpush.msra.mxu0 %v140
    %456 = vmatmul.f32.gmra.mxu0 %v438
    %v457 = vpop.f32.mrf.mxu0
    %v458 = vadd.f32 %v131, %v457
    %459 = vdwg.mxu0
    %v460 = vadd.f32 %v458, %v397
    %v461 = vxor.u32 %v460, 2147483648
    %v462 = vmul.f32 %v461, 1.442695
    %v463 = vpow.pop %v462
    %v464 = vadd.f32 %v463, 1.0
    %v465 = vrcp.pop %v464
    %v466 = vmul.f32 %v464, %v465
    %v467 = vsub.f32 1.0, %v466
    %v468 = vmul.f32 %v465, %v467
    %v469 = vadd.f32 %v465, %v468
    %vm470 = vweird.f32 %v464
    %vm471 = vweird.f32 %v465
    %vm472 = vmor %vm470, %vm471
    %v473 = vsel %vm472, %v465, %v469
    %v474 = vand.u32 2147483647, %v464
    %vm475 = vcmp.eq.f32.partialorder %v474, 8.507059e+37
    %v476 = vand.u32 %v464, 2147483648
    %v477 = vor.u32 1.1754944e-38, %v476
    %v478 = vsel %vm475, %v477, %v473
    %v479 = vmul.f32 1.0, %v478
    %v480 = vtanh.pop %v460
    %v481 = vmul.f32 %v479, %v342
    %483 = vrot.lane.b32.xlu0 %v480, 32
    %v484 = vpop.permute.xlu0 %483
    %v486 = vmul.f32 %v479, %v484
    %488 = vrot.lane.b32.xlu0 %v486, 32
    %v489 = vpop.permute.xlu0 %488
    %v491 = vadd.f32 %v481, %v489
    %v492 = vtanh.pop %v491
    %494 = vrot.lane.b32.xlu0 %v492, 32
    %v495 = vpop.permute.xlu0 %494
    %v497 = vmul.f32 %v479, %v495
    %499 = vrot.lane.b32.xlu0 %v497, 64
    %v500 = vpop.permute.xlu0 %499
    %502 = vst.msk [vmem:[%s5 + $0x8] sm:$0xff] %vm144, %v500
    %504 = vrot.lane.b32.xlu0 %v437, 64
    %v505 = vpop.permute.xlu0 %504
    %v506 = vsel %vm144, %v505, 0
    %508 = vmatpush.msra.mxu0 0.0
    %509 = vmatpush.msra.mxu0 0.0
    %510 = vmatpush.msra.mxu0 0.0
    %511 = vmatpush.msra.mxu0 0.0
    %512 = vmatpush.msra.mxu0 0.0
    %513 = vmatpush.msra.mxu0 0.0
    %514 = vmatpush.msra.mxu0 0.0
    %515 = vmatpush.msra.mxu0 0.0
    %516 = vmatpush.msra.mxu0 0.0
    %517 = vmatpush.msra.mxu0 0.0
    %518 = vmatpush.msra.mxu0 0.0
    %519 = vmatpush.msra.mxu0 0.0
    %520 = vmatpush.msra.mxu0 %v138
    %521 = vmatpush.msra.mxu0 %v136
    %522 = vmatpush.msra.mxu0 %v134
    %523 = vmatpush.msra.mxu0 %v132
    %524 = vmatmul.f32.gmra.mxu0 %v506
    %v525 = vpop.f32.mrf.mxu0
    %v526 = vadd.f32 0.0, %v525
    %527 = vdwg.mxu0
    %528 = vmatpush.msra.mxu0 0.0
    %529 = vmatpush.msra.mxu0 0.0
    %530 = vmatpush.msra.mxu0 0.0
    %531 = vmatpush.msra.mxu0 0.0
    %532 = vmatpush.msra.mxu0 0.0
    %533 = vmatpush.msra.mxu0 0.0
    %534 = vmatpush.msra.mxu0 0.0
    %535 = vmatpush.msra.mxu0 0.0
    %536 = vmatpush.msra.mxu0 0.0
    %537 = vmatpush.msra.mxu0 0.0
    %538 = vmatpush.msra.mxu0 0.0
    %539 = vmatpush.msra.mxu0 0.0
    %540 = vmatpush.msra.mxu0 %v139
    %541 = vmatpush.msra.mxu0 %v137
    %542 = vmatpush.msra.mxu0 %v135
    %543 = vmatpush.msra.mxu0 %v133
    %544 = vmatmul.f32.gmra.mxu0 %v506
    %v545 = vpop.f32.mrf.mxu0
    %v546 = vadd.f32 0.0, %v545
    %547 = vdwg.mxu0
    %v548 = vadd.f32 %v526, %v130
    %v549 = vadd.f32 %v548, %v116
    %v550 = vxor.u32 %v549, 2147483648
    %v551 = vmul.f32 %v550, 1.442695
    %v552 = vpow.pop %v551
    %v553 = vadd.f32 %v552, 1.0
    %v554 = vrcp.pop %v553
    %v555 = vmul.f32 %v553, %v554
    %v556 = vsub.f32 1.0, %v555
    %v557 = vmul.f32 %v554, %v556
    %v558 = vadd.f32 %v554, %v557
    %vm559 = vweird.f32 %v553
    %vm560 = vweird.f32 %v554
    %vm561 = vmor %vm559, %vm560
    %v562 = vsel %vm561, %v554, %v558
    %v563 = vand.u32 2147483647, %v553
    %vm564 = vcmp.eq.f32.partialorder %v563, 8.507059e+37
    %v565 = vand.u32 %v553, 2147483648
    %v566 = vor.u32 1.1754944e-38, %v565
    %v567 = vsel %vm564, %v566, %v562
    %v568 = vmul.f32 1.0, %v567
    %v569 = vtanh.pop %v549
    %v570 = vmul.f32 %v568, %v431
    %572 = vrot.lane.b32.xlu0 %v569, 32
    %v573 = vpop.permute.xlu0 %572
    %v575 = vmul.f32 %v568, %v573
    %577 = vrot.lane.b32.xlu0 %v575, 32
    %v578 = vpop.permute.xlu0 %577
    %v580 = vadd.f32 %v570, %v578
    %v581 = vtanh.pop %v580
    %583 = vrot.lane.b32.xlu0 %v581, 32
    %v584 = vpop.permute.xlu0 %583
    %v586 = vmul.f32 %v568, %v584
    %v587 = vsel %vm144, %v500, 0
    %589 = vmatpush.msra.mxu0 0.0
    %590 = vmatpush.msra.mxu0 0.0
    %591 = vmatpush.msra.mxu0 0.0
    %592 = vmatpush.msra.mxu0 0.0
    %593 = vmatpush.msra.mxu0 0.0
    %594 = vmatpush.msra.mxu0 0.0
    %595 = vmatpush.msra.mxu0 0.0
    %596 = vmatpush.msra.mxu0 0.0
    %597 = vmatpush.msra.mxu0 0.0
    %598 = vmatpush.msra.mxu0 0.0
    %599 = vmatpush.msra.mxu0 0.0
    %600 = vmatpush.msra.mxu0 0.0
    %601 = vmatpush.msra.mxu0 %v143
    %602 = vmatpush.msra.mxu0 %v142
    %603 = vmatpush.msra.mxu0 %v141
    %604 = vmatpush.msra.mxu0 %v140
    %605 = vmatmul.f32.gmra.mxu0 %v587
    %v606 = vpop.f32.mrf.mxu0
    %v607 = vadd.f32 %v131, %v606
    %608 = vdwg.mxu0
    %v609 = vadd.f32 %v607, %v546
    %v610 = vxor.u32 %v609, 2147483648
    %v611 = vmul.f32 %v610, 1.442695
    %v612 = vpow.pop %v611
    %v613 = vadd.f32 %v612, 1.0
    %v614 = vrcp.pop %v613
    %v615 = vmul.f32 %v613, %v614
    %v616 = vsub.f32 1.0, %v615
    %v617 = vmul.f32 %v614, %v616
    %v618 = vadd.f32 %v614, %v617
    %vm619 = vweird.f32 %v613
    %vm620 = vweird.f32 %v614
    %vm621 = vmor %vm619, %vm620
    %v622 = vsel %vm621, %v614, %v618
    %v623 = vand.u32 2147483647, %v613
    %vm624 = vcmp.eq.f32.partialorder %v623, 8.507059e+37
    %v625 = vand.u32 %v613, 2147483648
    %v626 = vor.u32 1.1754944e-38, %v625
    %v627 = vsel %vm624, %v626, %v622
    %v628 = vmul.f32 1.0, %v627
    %v629 = vtanh.pop %v609
    %v630 = vmul.f32 %v628, %v491
    %632 = vrot.lane.b32.xlu0 %v629, 32
    %v633 = vpop.permute.xlu0 %632
    %v635 = vmul.f32 %v628, %v633
    %637 = vrot.lane.b32.xlu0 %v635, 32
    %v638 = vpop.permute.xlu0 %637
    %v640 = vadd.f32 %v630, %v638
    %v641 = vtanh.pop %v640
    %643 = vrot.lane.b32.xlu0 %v641, 32
    %v644 = vpop.permute.xlu0 %643
    %v646 = vmul.f32 %v628, %v644
    %648 = vrot.lane.b32.xlu0 %v646, 64
    %v649 = vpop.permute.xlu0 %648
    %651 = vst.msk [vmem:[%s5 + $0x10] sm:$0xff] %vm144, %v649
    %653 = vrot.lane.b32.xlu0 %v586, 64
    %v654 = vpop.permute.xlu0 %653
    %v655 = vsel %vm144, %v654, 0
    %657 = vmatpush.msra.mxu0 0.0
    %658 = vmatpush.msra.mxu0 0.0
    %659 = vmatpush.msra.mxu0 0.0
    %660 = vmatpush.msra.mxu0 0.0
    %661 = vmatpush.msra.mxu0 0.0
    %662 = vmatpush.msra.mxu0 0.0
    %663 = vmatpush.msra.mxu0 0.0
    %664 = vmatpush.msra.mxu0 0.0
    %665 = vmatpush.msra.mxu0 0.0
    %666 = vmatpush.msra.mxu0 0.0
    %667 = vmatpush.msra.mxu0 0.0
    %668 = vmatpush.msra.mxu0 0.0
    %669 = vmatpush.msra.mxu0 %v138
    %670 = vmatpush.msra.mxu0 %v136
    %671 = vmatpush.msra.mxu0 %v134
    %672 = vmatpush.msra.mxu0 %v132
    %673 = vmatmul.f32.gmra.mxu0 %v655
    %v674 = vpop.f32.mrf.mxu0
    %v675 = vadd.f32 0.0, %v674
    %676 = vdwg.mxu0
    %677 = vmatpush.msra.mxu0 0.0
    %678 = vmatpush.msra.mxu0 0.0
    %679 = vmatpush.msra.mxu0 0.0
    %680 = vmatpush.msra.mxu0 0.0
    %681 = vmatpush.msra.mxu0 0.0
    %682 = vmatpush.msra.mxu0 0.0
    %683 = vmatpush.msra.mxu0 0.0
    %684 = vmatpush.msra.mxu0 0.0
    %685 = vmatpush.msra.mxu0 0.0
    %686 = vmatpush.msra.mxu0 0.0
    %687 = vmatpush.msra.mxu0 0.0
    %688 = vmatpush.msra.mxu0 0.0
    %689 = vmatpush.msra.mxu0 %v139
    %690 = vmatpush.msra.mxu0 %v137
    %691 = vmatpush.msra.mxu0 %v135
    %692 = vmatpush.msra.mxu0 %v133
    %693 = vmatmul.f32.gmra.mxu0 %v655
    %v694 = vpop.f32.mrf.mxu0
    %v695 = vadd.f32 0.0, %v694
    %696 = vdwg.mxu0
    %v697 = vadd.f32 %v675, %v130
    %v698 = vadd.f32 %v697, %v119
    %v699 = vxor.u32 %v698, 2147483648
    %v700 = vmul.f32 %v699, 1.442695
    %v701 = vpow.pop %v700
    %v702 = vadd.f32 %v701, 1.0
    %v703 = vrcp.pop %v702
    %v704 = vmul.f32 %v702, %v703
    %v705 = vsub.f32 1.0, %v704
    %v706 = vmul.f32 %v703, %v705
    %v707 = vadd.f32 %v703, %v706
    %vm708 = vweird.f32 %v702
    %vm709 = vweird.f32 %v703
    %vm710 = vmor %vm708, %vm709
    %v711 = vsel %vm710, %v703, %v707
    %v712 = vand.u32 2147483647, %v702
    %vm713 = vcmp.eq.f32.partialorder %v712, 8.507059e+37
    %v714 = vand.u32 %v702, 2147483648
    %v715 = vor.u32 1.1754944e-38, %v714
    %v716 = vsel %vm713, %v715, %v711
    %v717 = vmul.f32 1.0, %v716
    %v718 = vtanh.pop %v698
    %v719 = vmul.f32 %v717, %v580
    %721 = vrot.lane.b32.xlu0 %v718, 32
    %v722 = vpop.permute.xlu0 %721
    %v724 = vmul.f32 %v717, %v722
    %726 = vrot.lane.b32.xlu0 %v724, 32
    %v727 = vpop.permute.xlu0 %726
    %v729 = vadd.f32 %v719, %v727
    %v730 = vtanh.pop %v729
    %732 = vrot.lane.b32.xlu0 %v730, 32
    %v733 = vpop.permute.xlu0 %732
    %v735 = vmul.f32 %v717, %v733
    %v736 = vsel %vm144, %v649, 0
    %738 = vmatpush.msra.mxu0 0.0
    %739 = vmatpush.msra.mxu0 0.0
    %740 = vmatpush.msra.mxu0 0.0
    %741 = vmatpush.msra.mxu0 0.0
    %742 = vmatpush.msra.mxu0 0.0
    %743 = vmatpush.msra.mxu0 0.0
    %744 = vmatpush.msra.mxu0 0.0
    %745 = vmatpush.msra.mxu0 0.0
    %746 = vmatpush.msra.mxu0 0.0
    %747 = vmatpush.msra.mxu0 0.0
    %748 = vmatpush.msra.mxu0 0.0
    %749 = vmatpush.msra.mxu0 0.0
    %750 = vmatpush.msra.mxu0 %v143
    %751 = vmatpush.msra.mxu0 %v142
    %752 = vmatpush.msra.mxu0 %v141
    %753 = vmatpush.msra.mxu0 %v140
    %754 = vmatmul.f32.gmra.mxu0 %v736
    %v755 = vpop.f32.mrf.mxu0
    %v756 = vadd.f32 %v131, %v755
    %757 = vdwg.mxu0
    %v758 = vadd.f32 %v756, %v695
    %v759 = vxor.u32 %v758, 2147483648
    %v760 = vmul.f32 %v759, 1.442695
    %v761 = vpow.pop %v760
    %v762 = vadd.f32 %v761, 1.0
    %v763 = vrcp.pop %v762
    %v764 = vmul.f32 %v762, %v763
    %v765 = vsub.f32 1.0, %v764
    %v766 = vmul.f32 %v763, %v765
    %v767 = vadd.f32 %v763, %v766
    %vm768 = vweird.f32 %v762
    %vm769 = vweird.f32 %v763
    %vm770 = vmor %vm768, %vm769
    %v771 = vsel %vm770, %v763, %v767
    %v772 = vand.u32 2147483647, %v762
    %vm773 = vcmp.eq.f32.partialorder %v772, 8.507059e+37
    %v774 = vand.u32 %v762, 2147483648
    %v775 = vor.u32 1.1754944e-38, %v774
    %v776 = vsel %vm773, %v775, %v771
    %v777 = vmul.f32 1.0, %v776
    %v778 = vtanh.pop %v758
    %v779 = vmul.f32 %v777, %v640
    %781 = vrot.lane.b32.xlu0 %v778, 32
    %v782 = vpop.permute.xlu0 %781
    %v784 = vmul.f32 %v777, %v782
    %786 = vrot.lane.b32.xlu0 %v784, 32
    %v787 = vpop.permute.xlu0 %786
    %v789 = vadd.f32 %v779, %v787
    %v790 = vtanh.pop %v789
    %792 = vrot.lane.b32.xlu0 %v790, 32
    %v793 = vpop.permute.xlu0 %792
    %v795 = vmul.f32 %v777, %v793
    %797 = vrot.lane.b32.xlu0 %v795, 64
    %v798 = vpop.permute.xlu0 %797
    %800 = vst.msk [vmem:[%s5 + $0x18] sm:$0xff] %vm144, %v798
    %802 = vrot.lane.b32.xlu0 %v735, 64
    %v803 = vpop.permute.xlu0 %802
    %v804 = vsel %vm144, %v803, 0
    %806 = vmatpush.msra.mxu0 0.0
    %807 = vmatpush.msra.mxu0 0.0
    %808 = vmatpush.msra.mxu0 0.0
    %809 = vmatpush.msra.mxu0 0.0
    %810 = vmatpush.msra.mxu0 0.0
    %811 = vmatpush.msra.mxu0 0.0
    %812 = vmatpush.msra.mxu0 0.0
    %813 = vmatpush.msra.mxu0 0.0
    %814 = vmatpush.msra.mxu0 0.0
    %815 = vmatpush.msra.mxu0 0.0
    %816 = vmatpush.msra.mxu0 0.0
    %817 = vmatpush.msra.mxu0 0.0
    %818 = vmatpush.msra.mxu0 %v138
    %819 = vmatpush.msra.mxu0 %v136
    %820 = vmatpush.msra.mxu0 %v134
    %821 = vmatpush.msra.mxu0 %v132
    %822 = vmatmul.f32.gmra.mxu0 %v804
    %v823 = vpop.f32.mrf.mxu0
    %v824 = vadd.f32 0.0, %v823
    %825 = vdwg.mxu0
    %826 = vmatpush.msra.mxu0 0.0
    %827 = vmatpush.msra.mxu0 0.0
    %828 = vmatpush.msra.mxu0 0.0
    %829 = vmatpush.msra.mxu0 0.0
    %830 = vmatpush.msra.mxu0 0.0
    %831 = vmatpush.msra.mxu0 0.0
    %832 = vmatpush.msra.mxu0 0.0
    %833 = vmatpush.msra.mxu0 0.0
    %834 = vmatpush.msra.mxu0 0.0
    %835 = vmatpush.msra.mxu0 0.0
    %836 = vmatpush.msra.mxu0 0.0
    %837 = vmatpush.msra.mxu0 0.0
    %838 = vmatpush.msra.mxu0 %v139
    %839 = vmatpush.msra.mxu0 %v137
    %840 = vmatpush.msra.mxu0 %v135
    %841 = vmatpush.msra.mxu0 %v133
    %842 = vmatmul.f32.gmra.mxu0 %v804
    %v843 = vpop.f32.mrf.mxu0
    %v844 = vadd.f32 0.0, %v843
    %845 = vdwg.mxu0
    %v846 = vadd.f32 %v824, %v130
    %v847 = vadd.f32 %v846, %v122
    %v848 = vxor.u32 %v847, 2147483648
    %v849 = vmul.f32 %v848, 1.442695
    %v850 = vpow.pop %v849
    %v851 = vadd.f32 %v850, 1.0
    %v852 = vrcp.pop %v851
    %v853 = vmul.f32 %v851, %v852
    %v854 = vsub.f32 1.0, %v853
    %v855 = vmul.f32 %v852, %v854
    %v856 = vadd.f32 %v852, %v855
    %vm857 = vweird.f32 %v851
    %vm858 = vweird.f32 %v852
    %vm859 = vmor %vm857, %vm858
    %v860 = vsel %vm859, %v852, %v856
    %v861 = vand.u32 2147483647, %v851
    %vm862 = vcmp.eq.f32.partialorder %v861, 8.507059e+37
    %v863 = vand.u32 %v851, 2147483648
    %v864 = vor.u32 1.1754944e-38, %v863
    %v865 = vsel %vm862, %v864, %v860
    %v866 = vmul.f32 1.0, %v865
    %v867 = vtanh.pop %v847
    %v868 = vmul.f32 %v866, %v729
    %870 = vrot.lane.b32.xlu0 %v867, 32
    %v871 = vpop.permute.xlu0 %870
    %v873 = vmul.f32 %v866, %v871
    %875 = vrot.lane.b32.xlu0 %v873, 32
    %v876 = vpop.permute.xlu0 %875
    %v878 = vadd.f32 %v868, %v876
    %v879 = vtanh.pop %v878
    %881 = vrot.lane.b32.xlu0 %v879, 32
    %v882 = vpop.permute.xlu0 %881
    %v884 = vmul.f32 %v866, %v882
    %v885 = vsel %vm144, %v798, 0
    %887 = vmatpush.msra.mxu0 0.0
    %888 = vmatpush.msra.mxu0 0.0
    %889 = vmatpush.msra.mxu0 0.0
    %890 = vmatpush.msra.mxu0 0.0
    %891 = vmatpush.msra.mxu0 0.0
    %892 = vmatpush.msra.mxu0 0.0
    %893 = vmatpush.msra.mxu0 0.0
    %894 = vmatpush.msra.mxu0 0.0
    %895 = vmatpush.msra.mxu0 0.0
    %896 = vmatpush.msra.mxu0 0.0
    %897 = vmatpush.msra.mxu0 0.0
    %898 = vmatpush.msra.mxu0 0.0
    %899 = vmatpush.msra.mxu0 %v143
    %900 = vmatpush.msra.mxu0 %v142
    %901 = vmatpush.msra.mxu0 %v141
    %902 = vmatpush.msra.mxu0 %v140
    %903 = vmatmul.f32.gmra.mxu0 %v885
    %v904 = vpop.f32.mrf.mxu0
    %v905 = vadd.f32 %v131, %v904
    %906 = vdwg.mxu0
    %v907 = vadd.f32 %v905, %v844
    %v908 = vxor.u32 %v907, 2147483648
    %v909 = vmul.f32 %v908, 1.442695
    %v910 = vpow.pop %v909
    %v911 = vadd.f32 %v910, 1.0
    %v912 = vrcp.pop %v911
    %v913 = vmul.f32 %v911, %v912
    %v914 = vsub.f32 1.0, %v913
    %v915 = vmul.f32 %v912, %v914
    %v916 = vadd.f32 %v912, %v915
    %vm917 = vweird.f32 %v911
    %vm918 = vweird.f32 %v912
    %vm919 = vmor %vm917, %vm918
    %v920 = vsel %vm919, %v912, %v916
    %v921 = vand.u32 2147483647, %v911
    %vm922 = vcmp.eq.f32.partialorder %v921, 8.507059e+37
    %v923 = vand.u32 %v911, 2147483648
    %v924 = vor.u32 1.1754944e-38, %v923
    %v925 = vsel %vm922, %v924, %v920
    %v926 = vmul.f32 1.0, %v925
    %v927 = vtanh.pop %v907
    %v928 = vmul.f32 %v926, %v789
    %930 = vrot.lane.b32.xlu0 %v927, 32
    %v931 = vpop.permute.xlu0 %930
    %v933 = vmul.f32 %v926, %v931
    %935 = vrot.lane.b32.xlu0 %v933, 32
    %v936 = vpop.permute.xlu0 %935
    %v938 = vadd.f32 %v928, %v936
    %v939 = vtanh.pop %v938
    %941 = vrot.lane.b32.xlu0 %v939, 32
    %v942 = vpop.permute.xlu0 %941
    %v944 = vmul.f32 %v926, %v942
    %946 = vrot.lane.b32.xlu0 %v944, 64
    %v947 = vpop.permute.xlu0 %946
    %949 = vst.msk [vmem:[%s5 + $0x20] sm:$0xff] %vm144, %v947
    %951 = vrot.lane.b32.xlu0 %v884, 64
    %v952 = vpop.permute.xlu0 %951
    %v953 = vsel %vm144, %v952, 0
    %955 = vmatpush.msra.mxu0 0.0
    %956 = vmatpush.msra.mxu0 0.0
    %957 = vmatpush.msra.mxu0 0.0
    %958 = vmatpush.msra.mxu0 0.0
    %959 = vmatpush.msra.mxu0 0.0
    %960 = vmatpush.msra.mxu0 0.0
    %961 = vmatpush.msra.mxu0 0.0
    %962 = vmatpush.msra.mxu0 0.0
    %963 = vmatpush.msra.mxu0 0.0
    %964 = vmatpush.msra.mxu0 0.0
    %965 = vmatpush.msra.mxu0 0.0
    %966 = vmatpush.msra.mxu0 0.0
    %967 = vmatpush.msra.mxu0 %v138
    %968 = vmatpush.msra.mxu0 %v136
    %969 = vmatpush.msra.mxu0 %v134
    %970 = vmatpush.msra.mxu0 %v132
    %971 = vmatmul.f32.gmra.mxu0 %v953
    %v972 = vpop.f32.mrf.mxu0
    %v973 = vadd.f32 0.0, %v972
    %974 = vdwg.mxu0
    %975 = vmatpush.msra.mxu0 0.0
    %976 = vmatpush.msra.mxu0 0.0
    %977 = vmatpush.msra.mxu0 0.0
    %978 = vmatpush.msra.mxu0 0.0
    %979 = vmatpush.msra.mxu0 0.0
    %980 = vmatpush.msra.mxu0 0.0
    %981 = vmatpush.msra.mxu0 0.0
    %982 = vmatpush.msra.mxu0 0.0
    %983 = vmatpush.msra.mxu0 0.0
    %984 = vmatpush.msra.mxu0 0.0
    %985 = vmatpush.msra.mxu0 0.0
    %986 = vmatpush.msra.mxu0 0.0
    %987 = vmatpush.msra.mxu0 %v139
    %988 = vmatpush.msra.mxu0 %v137
    %989 = vmatpush.msra.mxu0 %v135
    %990 = vmatpush.msra.mxu0 %v133
    %991 = vmatmul.f32.gmra.mxu0 %v953
    %v992 = vpop.f32.mrf.mxu0
    %v993 = vadd.f32 0.0, %v992
    %994 = vdwg.mxu0
    %v995 = vadd.f32 %v973, %v130
    %v996 = vadd.f32 %v995, %v125
    %v997 = vxor.u32 %v996, 2147483648
    %v998 = vmul.f32 %v997, 1.442695
    %v999 = vpow.pop %v998
    %v1000 = vadd.f32 %v999, 1.0
    %v1001 = vrcp.pop %v1000
    %v1002 = vmul.f32 %v1000, %v1001
    %v1003 = vsub.f32 1.0, %v1002
    %v1004 = vmul.f32 %v1001, %v1003
    %v1005 = vadd.f32 %v1001, %v1004
    %vm1006 = vweird.f32 %v1000
    %vm1007 = vweird.f32 %v1001
    %vm1008 = vmor %vm1006, %vm1007
    %v1009 = vsel %vm1008, %v1001, %v1005
    %v1010 = vand.u32 2147483647, %v1000
    %vm1011 = vcmp.eq.f32.partialorder %v1010, 8.507059e+37
    %v1012 = vand.u32 %v1000, 2147483648
    %v1013 = vor.u32 1.1754944e-38, %v1012
    %v1014 = vsel %vm1011, %v1013, %v1009
    %v1015 = vmul.f32 1.0, %v1014
    %v1016 = vtanh.pop %v996
    %v1017 = vmul.f32 %v1015, %v878
    %1019 = vrot.lane.b32.xlu0 %v1016, 32
    %v1020 = vpop.permute.xlu0 %1019
    %v1022 = vmul.f32 %v1015, %v1020
    %1024 = vrot.lane.b32.xlu0 %v1022, 32
    %v1025 = vpop.permute.xlu0 %1024
    %v1027 = vadd.f32 %v1017, %v1025
    %v1028 = vtanh.pop %v1027
    %1030 = vrot.lane.b32.xlu0 %v1028, 32
    %v1031 = vpop.permute.xlu0 %1030
    %v1033 = vmul.f32 %v1015, %v1031
    %v1034 = vsel %vm144, %v947, 0
    %1036 = vmatpush.msra.mxu0 0.0
    %1037 = vmatpush.msra.mxu0 0.0
    %1038 = vmatpush.msra.mxu0 0.0
    %1039 = vmatpush.msra.mxu0 0.0
    %1040 = vmatpush.msra.mxu0 0.0
    %1041 = vmatpush.msra.mxu0 0.0
    %1042 = vmatpush.msra.mxu0 0.0
    %1043 = vmatpush.msra.mxu0 0.0
    %1044 = vmatpush.msra.mxu0 0.0
    %1045 = vmatpush.msra.mxu0 0.0
    %1046 = vmatpush.msra.mxu0 0.0
    %1047 = vmatpush.msra.mxu0 0.0
    %1048 = vmatpush.msra.mxu0 %v143
    %1049 = vmatpush.msra.mxu0 %v142
    %1050 = vmatpush.msra.mxu0 %v141
    %1051 = vmatpush.msra.mxu0 %v140
    %1052 = vmatmul.f32.gmra.mxu0 %v1034
    %v1053 = vpop.f32.mrf.mxu0
    %v1054 = vadd.f32 %v131, %v1053
    %1055 = vdwg.mxu0
    %v1056 = vadd.f32 %v1054, %v993
    %v1057 = vxor.u32 %v1056, 2147483648
    %v1058 = vmul.f32 %v1057, 1.442695
    %v1059 = vpow.pop %v1058
    %v1060 = vadd.f32 %v1059, 1.0
    %v1061 = vrcp.pop %v1060
    %v1062 = vmul.f32 %v1060, %v1061
    %v1063 = vsub.f32 1.0, %v1062
    %v1064 = vmul.f32 %v1061, %v1063
    %v1065 = vadd.f32 %v1061, %v1064
    %vm1066 = vweird.f32 %v1060
    %vm1067 = vweird.f32 %v1061
    %vm1068 = vmor %vm1066, %vm1067
    %v1069 = vsel %vm1068, %v1061, %v1065
    %v1070 = vand.u32 2147483647, %v1060
    %vm1071 = vcmp.eq.f32.partialorder %v1070, 8.507059e+37
    %v1072 = vand.u32 %v1060, 2147483648
    %v1073 = vor.u32 1.1754944e-38, %v1072
    %v1074 = vsel %vm1071, %v1073, %v1069
    %v1075 = vmul.f32 1.0, %v1074
    %v1076 = vtanh.pop %v1056
    %v1077 = vmul.f32 %v1075, %v938
    %1079 = vrot.lane.b32.xlu0 %v1076, 32
    %v1080 = vpop.permute.xlu0 %1079
    %v1082 = vmul.f32 %v1075, %v1080
    %1084 = vrot.lane.b32.xlu0 %v1082, 32
    %v1085 = vpop.permute.xlu0 %1084
    %v1087 = vadd.f32 %v1077, %v1085
    %v1088 = vtanh.pop %v1087
    %1090 = vrot.lane.b32.xlu0 %v1088, 32
    %v1091 = vpop.permute.xlu0 %1090
    %v1093 = vmul.f32 %v1075, %v1091
    %1095 = vrot.lane.b32.xlu0 %v1093, 64
    %v1096 = vpop.permute.xlu0 %1095
    %1098 = vst.msk [vmem:[%s5 + $0x28] sm:$0xff] %vm144, %v1096
    %1100 = vrot.lane.b32.xlu0 %v1033, 64
    %v1101 = vpop.permute.xlu0 %1100
    %v1102 = vsel %vm144, %v1101, 0
    %1104 = vmatpush.msra.mxu0 0.0
    %1105 = vmatpush.msra.mxu0 0.0
    %1106 = vmatpush.msra.mxu0 0.0
    %1107 = vmatpush.msra.mxu0 0.0
    %1108 = vmatpush.msra.mxu0 0.0
    %1109 = vmatpush.msra.mxu0 0.0
    %1110 = vmatpush.msra.mxu0 0.0
    %1111 = vmatpush.msra.mxu0 0.0
    %1112 = vmatpush.msra.mxu0 0.0
    %1113 = vmatpush.msra.mxu0 0.0
    %1114 = vmatpush.msra.mxu0 0.0
    %1115 = vmatpush.msra.mxu0 0.0
    %1116 = vmatpush.msra.mxu0 %v138
    %1117 = vmatpush.msra.mxu0 %v136
    %1118 = vmatpush.msra.mxu0 %v134
    %1119 = vmatpush.msra.mxu0 %v132
    %1120 = vmatmul.f32.gmra.mxu0 %v1102
    %v1121 = vpop.f32.mrf.mxu0
    %v1122 = vadd.f32 0.0, %v1121
    %1123 = vdwg.mxu0
    %1124 = vmatpush.msra.mxu0 0.0
    %1125 = vmatpush.msra.mxu0 0.0
    %1126 = vmatpush.msra.mxu0 0.0
    %1127 = vmatpush.msra.mxu0 0.0
    %1128 = vmatpush.msra.mxu0 0.0
    %1129 = vmatpush.msra.mxu0 0.0
    %1130 = vmatpush.msra.mxu0 0.0
    %1131 = vmatpush.msra.mxu0 0.0
    %1132 = vmatpush.msra.mxu0 0.0
    %1133 = vmatpush.msra.mxu0 0.0
    %1134 = vmatpush.msra.mxu0 0.0
    %1135 = vmatpush.msra.mxu0 0.0
    %1136 = vmatpush.msra.mxu0 %v139
    %1137 = vmatpush.msra.mxu0 %v137
    %1138 = vmatpush.msra.mxu0 %v135
    %1139 = vmatpush.msra.mxu0 %v133
    %1140 = vmatmul.f32.gmra.mxu0 %v1102
    %v1141 = vpop.f32.mrf.mxu0
    %v1142 = vadd.f32 0.0, %v1141
    %1143 = vdwg.mxu0
    %v1144 = vadd.f32 %v1122, %v130
    %v1145 = vadd.f32 %v1144, %v128
    %v1146 = vxor.u32 %v1145, 2147483648
    %v1147 = vmul.f32 %v1146, 1.442695
    %v1148 = vpow.pop %v1147
    %v1149 = vadd.f32 %v1148, 1.0
    %v1150 = vrcp.pop %v1149
    %v1151 = vmul.f32 %v1149, %v1150
    %v1152 = vsub.f32 1.0, %v1151
    %v1153 = vmul.f32 %v1150, %v1152
    %v1154 = vadd.f32 %v1150, %v1153
    %vm1155 = vweird.f32 %v1149
    %vm1156 = vweird.f32 %v1150
    %vm1157 = vmor %vm1155, %vm1156
    %v1158 = vsel %vm1157, %v1150, %v1154
    %v1159 = vand.u32 2147483647, %v1149
    %vm1160 = vcmp.eq.f32.partialorder %v1159, 8.507059e+37
    %v1161 = vand.u32 %v1149, 2147483648
    %v1162 = vor.u32 1.1754944e-38, %v1161
    %v1163 = vsel %vm1160, %v1162, %v1158
    %v1164 = vmul.f32 1.0, %v1163
    %v1165 = vtanh.pop %v1145
    %v1166 = vmul.f32 %v1164, %v1027
    %1168 = vrot.lane.b32.xlu0 %v1165, 32
    %v1169 = vpop.permute.xlu0 %1168
    %v1171 = vmul.f32 %v1164, %v1169
    %1173 = vrot.lane.b32.xlu0 %v1171, 32
    %v1174 = vpop.permute.xlu0 %1173
    %v1176 = vadd.f32 %v1166, %v1174
    %v1177 = vtanh.pop %v1176
    %1179 = vrot.lane.b32.xlu0 %v1177, 32
    %v1180 = vpop.permute.xlu0 %1179
    %v1182 = vmul.f32 %v1164, %v1180
    %v1183 = vsel %vm144, %v1096, 0
    %1185 = vmatpush.msra.mxu0 0.0
    %1186 = vmatpush.msra.mxu0 0.0
    %1187 = vmatpush.msra.mxu0 0.0
    %1188 = vmatpush.msra.mxu0 0.0
    %1189 = vmatpush.msra.mxu0 0.0
    %1190 = vmatpush.msra.mxu0 0.0
    %1191 = vmatpush.msra.mxu0 0.0
    %1192 = vmatpush.msra.mxu0 0.0
    %1193 = vmatpush.msra.mxu0 0.0
    %1194 = vmatpush.msra.mxu0 0.0
    %1195 = vmatpush.msra.mxu0 0.0
    %1196 = vmatpush.msra.mxu0 0.0
    %1197 = vmatpush.msra.mxu0 %v143
    %1198 = vmatpush.msra.mxu0 %v142
    %1199 = vmatpush.msra.mxu0 %v141
    %1200 = vmatpush.msra.mxu0 %v140
    %1201 = vmatmul.f32.gmra.mxu0 %v1183
    %v1202 = vpop.f32.mrf.mxu0
    %v1203 = vadd.f32 %v131, %v1202
    %1204 = vdwg.mxu0
    %v1205 = vadd.f32 %v1203, %v1142
    %v1206 = vxor.u32 %v1205, 2147483648
    %v1207 = vmul.f32 %v1206, 1.442695
    %v1208 = vpow.pop %v1207
    %v1209 = vadd.f32 %v1208, 1.0
    %v1210 = vrcp.pop %v1209
    %v1211 = vmul.f32 %v1209, %v1210
    %v1212 = vsub.f32 1.0, %v1211
    %v1213 = vmul.f32 %v1210, %v1212
    %v1214 = vadd.f32 %v1210, %v1213
    %vm1215 = vweird.f32 %v1209
    %vm1216 = vweird.f32 %v1210
    %vm1217 = vmor %vm1215, %vm1216
    %v1218 = vsel %vm1217, %v1210, %v1214
    %v1219 = vand.u32 2147483647, %v1209
    %vm1220 = vcmp.eq.f32.partialorder %v1219, 8.507059e+37
    %v1221 = vand.u32 %v1209, 2147483648
    %v1222 = vor.u32 1.1754944e-38, %v1221
    %v1223 = vsel %vm1220, %v1222, %v1218
    %v1224 = vmul.f32 1.0, %v1223
    %v1225 = vtanh.pop %v1205
    %v1226 = vmul.f32 %v1224, %v1087
    %1228 = vrot.lane.b32.xlu0 %v1225, 32
    %v1229 = vpop.permute.xlu0 %1228
    %v1231 = vmul.f32 %v1224, %v1229
    %1233 = vrot.lane.b32.xlu0 %v1231, 32
    %v1234 = vpop.permute.xlu0 %1233
    %v1236 = vadd.f32 %v1226, %v1234
    %v1237 = vtanh.pop %v1236
    %1239 = vrot.lane.b32.xlu0 %v1237, 32
    %v1240 = vpop.permute.xlu0 %1239
    %v1242 = vmul.f32 %v1224, %v1240
    %1244 = vrot.lane.b32.xlu0 %v1242, 64
    %v1245 = vpop.permute.xlu0 %1244
    %1247 = vst.msk [vmem:[%s5 + $0x30] sm:$0xff] %vm144, %v1245
    %1249 = vrot.lane.b32.xlu0 %v1182, 64
    %v1250 = vpop.permute.xlu0 %1249
    %v1251 = vsel %vm144, %v1250, 0
    %1253 = vmatpush.msra.mxu0 0.0
    %1254 = vmatpush.msra.mxu0 0.0
    %1255 = vmatpush.msra.mxu0 0.0
    %1256 = vmatpush.msra.mxu0 0.0
    %1257 = vmatpush.msra.mxu0 0.0
    %1258 = vmatpush.msra.mxu0 0.0
    %1259 = vmatpush.msra.mxu0 0.0
    %1260 = vmatpush.msra.mxu0 0.0
    %1261 = vmatpush.msra.mxu0 0.0
    %1262 = vmatpush.msra.mxu0 0.0
    %1263 = vmatpush.msra.mxu0 0.0
    %1264 = vmatpush.msra.mxu0 0.0
    %1265 = vmatpush.msra.mxu0 %v139
    %1266 = vmatpush.msra.mxu0 %v137
    %1267 = vmatpush.msra.mxu0 %v135
    %1268 = vmatpush.msra.mxu0 %v133
    %1269 = vmatmul.f32.gmra.mxu0 %v1251
    %v1270 = vpop.f32.mrf.mxu0
    %v1271 = vadd.f32 0.0, %v1270
    %1272 = vdwg.mxu0
    %v1273 = vsel %vm144, %v1245, 0
    %1275 = vmatpush.msra.mxu0 0.0
    %1276 = vmatpush.msra.mxu0 0.0
    %1277 = vmatpush.msra.mxu0 0.0
    %1278 = vmatpush.msra.mxu0 0.0
    %1279 = vmatpush.msra.mxu0 0.0
    %1280 = vmatpush.msra.mxu0 0.0
    %1281 = vmatpush.msra.mxu0 0.0
    %1282 = vmatpush.msra.mxu0 0.0
    %1283 = vmatpush.msra.mxu0 0.0
    %1284 = vmatpush.msra.mxu0 0.0
    %1285 = vmatpush.msra.mxu0 0.0
    %1286 = vmatpush.msra.mxu0 0.0
    %1287 = vmatpush.msra.mxu0 %v143
    %1288 = vmatpush.msra.mxu0 %v142
    %1289 = vmatpush.msra.mxu0 %v141
    %1290 = vmatpush.msra.mxu0 %v140
    %1291 = vmatmul.f32.gmra.mxu0 %v1273
    %v1292 = vpop.f32.mrf.mxu0
    %v1293 = vadd.f32 %v131, %v1292
    %1294 = vdwg.mxu0
    %v1295 = vadd.f32 %v1293, %v1271
    %v1296 = vxor.u32 %v1295, 2147483648
    %v1297 = vmul.f32 %v1296, 1.442695
    %v1298 = vpow.pop %v1297
    %v1299 = vadd.f32 %v1298, 1.0
    %v1300 = vrcp.pop %v1299
    %v1301 = vmul.f32 %v1299, %v1300
    %v1302 = vsub.f32 1.0, %v1301
    %v1303 = vmul.f32 %v1300, %v1302
    %v1304 = vadd.f32 %v1300, %v1303
    %vm1305 = vweird.f32 %v1299
    %vm1306 = vweird.f32 %v1300
    %vm1307 = vmor %vm1305, %vm1306
    %v1308 = vsel %vm1307, %v1300, %v1304
    %v1309 = vand.u32 2147483647, %v1299
    %vm1310 = vcmp.eq.f32.partialorder %v1309, 8.507059e+37
    %v1311 = vand.u32 %v1299, 2147483648
    %v1312 = vor.u32 1.1754944e-38, %v1311
    %v1313 = vsel %vm1310, %v1312, %v1308
    %v1314 = vmul.f32 1.0, %v1313
    %v1315 = vtanh.pop %v1295
    %v1316 = vmul.f32 %v1314, %v1236
    %1318 = vrot.lane.b32.xlu0 %v1315, 32
    %v1319 = vpop.permute.xlu0 %1318
    %v1321 = vmul.f32 %v1314, %v1319
    %1323 = vrot.lane.b32.xlu0 %v1321, 32
    %v1324 = vpop.permute.xlu0 %1323
    %v1326 = vadd.f32 %v1316, %v1324
    %v1327 = vtanh.pop %v1326
    %1329 = vrot.lane.b32.xlu0 %v1327, 32
    %v1330 = vpop.permute.xlu0 %1329
    %v1332 = vmul.f32 %v1314, %v1330
    %1334 = vrot.lane.b32.xlu0 %v1332, 64
    %v1335 = vpop.permute.xlu0 %1334
    %1337 = vst.msk [vmem:[%s5 + $0x38] sm:$0xff] %vm144, %v1335
    // Predicated region
    $region30: #{tpu_custom_call.1} parent=1 // pred_check
      _
    $region31: #{tpu_custom_call.1} parent=1 // pred_check_branch
      %1339 = sbr.rel (0) target = $region33
    $region32: #{tpu_custom_call.1} parent=1 // pred_region
      _
    $region33: #{tpu_custom_call.1} parent=1 // pred_fallthru
      _
    // Predicated region
    $region34: #{tpu_custom_call.1} parent=1 // pred_check
      _
    $region35: #{tpu_custom_call.1} parent=1 // pred_check_branch
      %1341 = sbr.rel (0) target = $region37
    $region36: #{tpu_custom_call.1} parent=1 // pred_region
      _
    $region37: #{tpu_custom_call.1} parent=1 // pred_fallthru
      _
    %1342 = vsyncpa [#allocation3], 1
    %1343 = vsyncpa [#allocation5], 1

</llo_original>
